<compile_context>
chip_gen: v7x
topology: tpu7x:2x2x1
jax: 0.10.0
libtpu: 0.0.40
codegen_flags: <defaults>
</compile_context>

<pallas_src>
import functools
import math

import jax
import jax.numpy as jnp
from jax import lax
from jax.experimental import pallas as pl
from jax.experimental.pallas import tpu as pltpu

LN_EPS = 1e-5  # torch.nn.LayerNorm default


def _layernorm(x, w, b):
    # f32 statistics, biased variance — matches PyTorch LayerNorm.
    mean = jnp.mean(x, axis=-1, keepdims=True)
    var = jnp.mean((x - mean) ** 2, axis=-1, keepdims=True)
    return (x - mean) * lax.rsqrt(var + LN_EPS) * w + b


# ---------------------------------------------------------------------------
# Fused kernel.  grid = (batch_tile, layer); activation (M, E) = (batch_tile*S, E)
# lives in a VMEM scratch across layers; head runs on the last layer step only.
# ---------------------------------------------------------------------------
def stp_kernel(x_ref,
               wqkv_ref, bqkv_ref, wo_ref, bo_ref,
               ln1w_ref, ln1b_ref, ln2w_ref, ln2b_ref,
               w1_ref, b1_ref, w2_ref, b2_ref,
               normw_ref, normb_ref, hw1_ref, hb1_ref, hw2_ref, hb2_ref,
               out_ref, x_scr,
               *, batch, seq, num_heads):
    layer = pl.program_id(1)

    @pl.when(layer == 0)
    def _():
        x_scr[...] = x_ref[...]

    x = x_scr[...]                              # (M, E) f32, resident activation
    M, E = x.shape
    H = num_heads
    D = E // H

    xb = x.astype(jnp.bfloat16)                 # bf16 MXU operands, f32 accumulation

    # ---- fused QKV projection: one lane-dense (M,E)@(E,3E) GEMM --------------------
    # 1/sqrt(D) is already folded into the Q columns; single fused bias add.
    qkv = jnp.dot(xb, wqkv_ref[...], preferred_element_type=jnp.float32) + bqkv_ref[...]

    # ---- per-head attention on tiny (S,S) tiles (no per-head GEMMs) ----------------
    head_outs = []
    for h in range(H):                          # static unroll; only small temporaries live
        q3 = qkv[:, h * D:(h + 1) * D].reshape(batch, seq, D).astype(jnp.bfloat16)
        k3 = qkv[:, E + h * D:E + (h + 1) * D].reshape(batch, seq, D).astype(jnp.bfloat16)
        v3 = qkv[:, 2 * E + h * D:2 * E + (h + 1) * D].reshape(batch, seq, D).astype(jnp.bfloat16)

        s = jnp.einsum('bqd,bkd->bqk', q3, k3,
                       preferred_element_type=jnp.float32)          # (B, S, S), pre-scaled
        s = s - jnp.max(s, axis=-1, keepdims=True)
        p = jnp.exp(s)
        p = p * pl.reciprocal(jnp.sum(p, axis=-1, keepdims=True), approx=True)
        o3 = jnp.einsum('bqk,bkd->bqd', p.astype(jnp.bfloat16), v3,
                        preferred_element_type=jnp.float32)         # (B, S, D)
        head_outs.append(o3.reshape(M, D))

    concat = jnp.concatenate(head_outs, axis=-1)                    # (M, E), head-major lanes

    # ---- fused output projection: one (M,E)@(E,E) GEMM, full contraction depth -----
    attn = jnp.dot(concat.astype(jnp.bfloat16), wo_ref[...],
                   preferred_element_type=jnp.float32) + bo_ref[...]

    # dropout(attn) is identity in eval mode
    y = _layernorm(x + attn, ln1w_ref[...], ln1b_ref[...])

    # ---- feed-forward ---------------------------------------------------------------
    h1 = jnp.maximum(
        jnp.dot(y.astype(jnp.bfloat16), w1_ref[...],
                preferred_element_type=jnp.float32) + b1_ref[...], 0.0)
    f = jnp.dot(h1.astype(jnp.bfloat16), w2_ref[...],
                preferred_element_type=jnp.float32) + b2_ref[...]
    z = _layernorm(y + f, ln2w_ref[...], ln2b_ref[...])

    x_scr[...] = z                              # carry activation to the next layer

    # ---- final LayerNorm + AdaptiveMaxPool1d(1) + MLP head, last layer only --------
    @pl.when(layer == pl.num_programs(1) - 1)
    def _():
        yf = _layernorm(z, normw_ref[...], normb_ref[...])          # (M, E)
        pooled = jnp.max(yf.reshape(batch, seq, E), axis=1)         # (B, E)
        hh = jnp.maximum(
            jnp.dot(pooled.astype(jnp.bfloat16), hw1_ref[...],
                    preferred_element_type=jnp.float32) + hb1_ref[...], 0.0)
        # F -> 1 projection as VPU multiply + lane reduction (avoid an N=1 MXU pass)
        res = jnp.sum(hh * hw2_ref[...], axis=-1, keepdims=True) + hb2_ref[...]  # (B, 1)
        out_ref[...] = res.reshape(1, batch, 1)


# ---------------------------------------------------------------------------
# Wrapper: one pallas_call for the whole model.
#   batch_tile:     rows of the batch handled per grid step on the "parallel" axis
#                   (use B // num_cores on v7x; default = whole batch).
#   weight_buffers: per-layer weight pipelining depth (set 3 on v5e to hide HBM).
# ---------------------------------------------------------------------------
def stp_forward(tokens, params, *, num_heads, batch_tile=None, weight_buffers=2):
    B, S = tokens.shape
    E = params['emb'].shape[1]
    L = params['wqkv'].shape[0]
    assert E % num_heads == 0
    if batch_tile is None:
        batch_tile = B
    assert B % batch_tile == 0
    NBT = B // batch_tile
    Mt = batch_tile * S

    # Embedding gather + positional encoding: plain-JAX glue (a gather has no clean
    # rectangular BlockSpec expression at this size; it fuses into a single XLA op).
    x = (params['emb'][tokens] + params['pos'][:, :S, :]).astype(jnp.float32)
    x = x.reshape(NBT, Mt, E)

    layer_names = ('wqkv', 'bqkv', 'wo', 'bo',
                   'ln1w', 'ln1b', 'ln2w', 'ln2b',
                   'w1', 'b1', 'w2', 'b2')
    head_names = ('norm_w', 'norm_b', 'hw1', 'hb1', 'hw2', 'hb2')
    layer_args = [params[n] for n in layer_names]
    head_args = [params[n] for n in head_names]

    def layer_spec(a):                 # stacked per-layer weight: pick slice `l`
        n_rest = a.ndim - 1

        def imap(bt, l, _n=n_rest):
            return (l,) + (0,) * _n

        kwargs = {}
        if weight_buffers > 2:
            kwargs['pipeline_mode'] = pl.Buffered(weight_buffers)
        return pl.BlockSpec((pl.Squeezed(),) + tuple(a.shape[1:]), imap, **kwargs)

    def const_spec(a):                 # shared across grid (stays resident)
        n = a.ndim

        def imap(bt, l, _n=n):
            return (0,) * _n

        return pl.BlockSpec(tuple(a.shape), imap)

    x_spec = pl.BlockSpec((pl.Squeezed(), Mt, E), lambda bt, l: (bt, 0, 0))
    out_spec = pl.BlockSpec((1, batch_tile, 1), lambda bt, l: (bt, 0, 0))

    in_specs = ([x_spec]
                + [layer_spec(a) for a in layer_args]
                + [const_spec(a) for a in head_args])

    # Explicit VMEM budget: buffered per-layer weight slices + resident consts +
    # activation input/scratch + headroom, clamped to v7x's 64 MiB physical budget.
    def _nbytes(a):
        return a.size * a.dtype.itemsize
    per_layer_bytes = sum(_nbytes(a) // a.shape[0] for a in layer_args)
    const_bytes = sum(_nbytes(a) for a in head_args) + 2 * Mt * E * 4
    scratch_bytes = Mt * E * 4
    vmem_limit = int(min(max(weight_buffers, 2) * per_layer_bytes
                         + const_bytes + scratch_bytes + (8 << 20),
                         64 << 20))

    kernel = functools.partial(stp_kernel, batch=batch_tile, seq=S, num_heads=num_heads)

    out = pl.pallas_call(
        kernel,
        out_shape=jax.ShapeDtypeStruct((NBT, batch_tile, 1), jnp.float32),
        grid=(NBT, L),
        in_specs=in_specs,
        out_specs=out_spec,
        scratch_shapes=[pltpu.VMEM((Mt, E), jnp.float32)],
        compiler_params=pltpu.CompilerParams(
            dimension_semantics=("parallel", "arbitrary"),
            vmem_limit_bytes=vmem_limit),
    )(x, *layer_args, *head_args)
    return out.reshape(B, 1)


# ---------------------------------------------------------------------------
# Deterministic parameter construction.
# Mapping from the PyTorch module (matmul weights pre-transposed & stored bf16,
# biases / LayerNorm params f32):
#   wqkv[l] = in_proj_weight.T  (E, 3E); columns [0:E]=Q (scaled by 1/sqrt(D)),
#             [E:2E]=K, [2E:3E]=V.            bqkv[l] = in_proj_bias (Q part scaled too).
#   wo[l]   = out_proj.weight.T (E, E);       bo[l]   = out_proj.bias.
#   w1/w2   = ffn Linear weights transposed;  hw1     = mlp_head[0].weight.T.
#   hw2     = mlp_head[2].weight (1, F) kept f32 (used as a VPU row, not an MXU operand).
# ---------------------------------------------------------------------------
def init_params(key, vocab_size, embed_size, num_heads, ff_hidden_dim,
                num_layers, max_seq_length):
    E, F, H, L = embed_size, ff_hidden_dim, num_heads, num_layers
    D = E // H
    scale = 1.0 / math.sqrt(D)
    keys = jax.random.split(key, 8 + num_layers)

    def dense(k, shape, s=0.05, dtype=jnp.bfloat16):
        return (jax.random.normal(k, shape, jnp.float32) * s).astype(dtype)

    wqkv, wo, w1, w2 = [], [], [], []
    for i in range(num_layers):
        lk = jax.random.split(keys[8 + i], 4)
        in_proj_t = jax.random.normal(lk[0], (E, 3 * E), jnp.float32) * 0.05
        in_proj_t = in_proj_t.at[:, :E].multiply(scale)   # fold attention scale into Q
        wqkv.append(in_proj_t.astype(jnp.bfloat16))
        wo.append(dense(lk[1], (E, E)))
        w1.append(dense(lk[2], (E, F)))
        w2.append(dense(lk[3], (F, E)))

    zeros = lambda s: jnp.zeros(s, jnp.float32)
    ones = lambda s: jnp.ones(s, jnp.float32)

    return dict(
        emb=dense(keys[0], (vocab_size, E), 0.1, jnp.float32),
        pos=dense(keys[1], (1, max_seq_length, E), 0.02, jnp.float32),
        # stacked per-layer params (leading layer axis)
        wqkv=jnp.stack(wqkv), bqkv=zeros((L, 1, 3 * E)),
        wo=jnp.stack(wo), bo=zeros((L, 1, E)),
        ln1w=ones((L, 1, E)), ln1b=zeros((L, 1, E)),
        ln2w=ones((L, 1, E)), ln2b=zeros((L, 1, E)),
        w1=jnp.stack(w1), b1=zeros((L, 1, F)),
        w2=jnp.stack(w2), b2=zeros((L, 1, E)),
        # head params
        norm_w=ones((1, E)), norm_b=zeros((1, E)),
        hw1=dense(keys[2], (E, F)), hb1=zeros((1, F)),
        hw2=dense(keys[3], (1, F), dtype=jnp.float32), hb2=zeros((1, 1)),
    )


if __name__ == "__main__":
    VOCAB, EMBED, HEADS, FF_HIDDEN, LAYERS, MAX_SEQ = 50, 32, 4, 64, 2, 16
    BATCH, SEQ = 2, 8

    key = jax.random.PRNGKey(0)
    pkey, tkey = jax.random.split(key)
    params = init_params(pkey, VOCAB, EMBED, HEADS, FF_HIDDEN, LAYERS, MAX_SEQ)
    tokens = jax.random.randint(tkey, (BATCH, SEQ), 0, VOCAB, dtype=jnp.int32)

    # batch_tile=1 exercises the leading "parallel" batch-tile axis (2 tiles x 2 layers).
    fwd = jax.jit(functools.partial(stp_forward, num_heads=HEADS, batch_tile=1))
    out = fwd(tokens, params)
    jax.block_until_ready(out)

    assert out.shape == (BATCH, 1)
    assert bool(jnp.all(jnp.isfinite(out)))
    print("KERNEL_OK")
</pallas_src>

<mosaic_0001>
module attributes {stable_mosaic.version = 11 : i64} {
  func.func @stp_kernel(%arg0: i32, %arg1: i32, %arg2: memref<1x8x32xf32, #tpu.memory_space<vmem>>, %arg3: memref<1x32x96xbf16, #tpu.memory_space<vmem>>, %arg4: memref<1x1x96xf32, #tpu.memory_space<vmem>>, %arg5: memref<1x32x32xbf16, #tpu.memory_space<vmem>>, %arg6: memref<1x1x32xf32, #tpu.memory_space<vmem>>, %arg7: memref<1x1x32xf32, #tpu.memory_space<vmem>>, %arg8: memref<1x1x32xf32, #tpu.memory_space<vmem>>, %arg9: memref<1x1x32xf32, #tpu.memory_space<vmem>>, %arg10: memref<1x1x32xf32, #tpu.memory_space<vmem>>, %arg11: memref<1x32x64xbf16, #tpu.memory_space<vmem>>, %arg12: memref<1x1x64xf32, #tpu.memory_space<vmem>>, %arg13: memref<1x64x32xbf16, #tpu.memory_space<vmem>>, %arg14: memref<1x1x32xf32, #tpu.memory_space<vmem>>, %arg15: memref<1x32xf32, #tpu.memory_space<vmem>>, %arg16: memref<1x32xf32, #tpu.memory_space<vmem>>, %arg17: memref<32x64xbf16, #tpu.memory_space<vmem>>, %arg18: memref<1x64xf32, #tpu.memory_space<vmem>>, %arg19: memref<1x64xf32, #tpu.memory_space<vmem>>, %arg20: memref<1x1xf32, #tpu.memory_space<vmem>>, %arg21: memref<1x1x1xf32, #tpu.memory_space<vmem>>, %arg22: memref<8x32xf32, #tpu.memory_space<vmem>>) attributes {dimension_semantics = [#tpu.dimension_semantics<parallel>, #tpu.dimension_semantics<arbitrary>], iteration_bounds = array<i64: 2, 2>, scalar_prefetch = 0 : i64, scratch_operands = 1 : i64, tpu.core_type = #tpu.core_type<tc>, window_params = [{transform_indices = @transform_0, window_bounds = array<i64: 1, 8, 32>}, {transform_indices = @transform_1, window_bounds = array<i64: 1, 32, 96>}, {transform_indices = @transform_2, window_bounds = array<i64: 1, 1, 96>}, {transform_indices = @transform_3, window_bounds = array<i64: 1, 32, 32>}, {transform_indices = @transform_4, window_bounds = array<i64: 1, 1, 32>}, {transform_indices = @transform_5, window_bounds = array<i64: 1, 1, 32>}, {transform_indices = @transform_6, window_bounds = array<i64: 1, 1, 32>}, {transform_indices = @transform_7, window_bounds = array<i64: 1, 1, 32>}, {transform_indices = @transform_8, window_bounds = array<i64: 1, 1, 32>}, {transform_indices = @transform_9, window_bounds = array<i64: 1, 32, 64>}, {transform_indices = @transform_10, window_bounds = array<i64: 1, 1, 64>}, {transform_indices = @transform_11, window_bounds = array<i64: 1, 64, 32>}, {transform_indices = @transform_12, window_bounds = array<i64: 1, 1, 32>}, {pipeline_mode = #tpu.pipeline_mode<synchronous>, transform_indices = @transform_13, window_bounds = array<i64: 1, 32>}, {pipeline_mode = #tpu.pipeline_mode<synchronous>, transform_indices = @transform_14, window_bounds = array<i64: 1, 32>}, {pipeline_mode = #tpu.pipeline_mode<synchronous>, transform_indices = @transform_15, window_bounds = array<i64: 32, 64>}, {pipeline_mode = #tpu.pipeline_mode<synchronous>, transform_indices = @transform_16, window_bounds = array<i64: 1, 64>}, {pipeline_mode = #tpu.pipeline_mode<synchronous>, transform_indices = @transform_17, window_bounds = array<i64: 1, 64>}, {pipeline_mode = #tpu.pipeline_mode<synchronous>, transform_indices = @transform_18, window_bounds = array<i64: 1, 1>}, {transform_indices = @transform_19, window_bounds = array<i64: 1, 1, 1>}]} {
    %c0_i32 = arith.constant 0 : i32
    %0 = arith.cmpi eq, %arg1, %c0_i32 : i32
    %1 = arith.extui %0 : i1 to i32
    %c0_i32_0 = arith.constant 0 : i32
    %2 = arith.cmpi ne, %1, %c0_i32_0 : i32
    scf.if %2 {
      %c0_71 = arith.constant 0 : index
      %c0_72 = arith.constant 0 : index
      %c0_73 = arith.constant 0 : index
      %189 = vector.load %arg2[%c0_71, %c0_72, %c0_73] : memref<1x8x32xf32, #tpu.memory_space<vmem>>, vector<1x8x32xf32>
      %190 = vector.shape_cast %189 : vector<1x8x32xf32> to vector<8x32xf32>
      %c0_74 = arith.constant 0 : index
      %c0_75 = arith.constant 0 : index
      %191 = vector.load %arg22[%c0_74, %c0_75] : memref<8x32xf32, #tpu.memory_space<vmem>>, vector<8x32xf32>
      tpu.vector_store %arg22[%c0_74, %c0_75], %190 {strides = array<i32>} : memref<8x32xf32, #tpu.memory_space<vmem>>, vector<8x32xf32>,
    } else {
    }
    %c0 = arith.constant 0 : index
    %c0_1 = arith.constant 0 : index
    %3 = vector.load %arg22[%c0, %c0_1] : memref<8x32xf32, #tpu.memory_space<vmem>>, vector<8x32xf32>
    %4 = arith.truncf %3 : vector<8x32xf32> to vector<8x32xbf16>
    %c0_2 = arith.constant 0 : index
    %c0_3 = arith.constant 0 : index
    %c0_4 = arith.constant 0 : index
    %5 = vector.load %arg3[%c0_2, %c0_3, %c0_4] : memref<1x32x96xbf16, #tpu.memory_space<vmem>>, vector<1x32x96xbf16>
    %6 = vector.shape_cast %5 : vector<1x32x96xbf16> to vector<32x96xbf16>
    %cst = arith.constant dense<0.000000e+00> : vector<8x96xf32>
    %7 = tpu.matmul %4, %6, %cst {dimension_numbers = #tpu.dot_dimension_numbers<[1], [0], [0], [1], [0, 0, 1, 1], [], []>} : vector<8x32xbf16>, vector<32x96xbf16>, vector<8x96xf32> -> vector<8x96xf32>
    %c0_5 = arith.constant 0 : index
    %c0_6 = arith.constant 0 : index
    %c0_7 = arith.constant 0 : index
    %8 = vector.load %arg4[%c0_5, %c0_6, %c0_7] : memref<1x1x96xf32, #tpu.memory_space<vmem>>, vector<1x1x96xf32>
    %9 = vector.shape_cast %8 : vector<1x1x96xf32> to vector<1x96xf32>
    %10 = vector.broadcast %9 : vector<1x96xf32> to vector<8x96xf32>
    %11 = arith.addf %7, %10 : vector<8x96xf32>
    %12 = vector.extract_strided_slice %11 {offsets = [0, 0], sizes = [8, 8], strides = [1, 1]} : vector<8x96xf32> to vector<8x8xf32>
    %13 = vector.shape_cast %12 : vector<8x8xf32> to vector<1x8x8xf32>
    %14 = arith.truncf %13 : vector<1x8x8xf32> to vector<1x8x8xbf16>
    %15 = vector.extract_strided_slice %11 {offsets = [0, 32], sizes = [8, 8], strides = [1, 1]} : vector<8x96xf32> to vector<8x8xf32>
    %16 = vector.shape_cast %15 : vector<8x8xf32> to vector<1x8x8xf32>
    %17 = arith.truncf %16 : vector<1x8x8xf32> to vector<1x8x8xbf16>
    %18 = vector.extract_strided_slice %11 {offsets = [0, 64], sizes = [8, 8], strides = [1, 1]} : vector<8x96xf32> to vector<8x8xf32>
    %19 = vector.shape_cast %18 : vector<8x8xf32> to vector<1x8x8xf32>
    %20 = arith.truncf %19 : vector<1x8x8xf32> to vector<1x8x8xbf16>
    "tpu.trace_start"() <{level = 10 : i32, message = "bqd,bkd->bqk"}> : () -> ()
    %cst_8 = arith.constant dense<0.000000e+00> : vector<1x8x8xf32>
    %21 = tpu.matmul %14, %17, %cst_8 {dimension_numbers = #tpu.dot_dimension_numbers<[2], [2], [1], [1], [0, 0, 0, 1, 1, 1], [0], [0]>} : vector<1x8x8xbf16>, vector<1x8x8xbf16>, vector<1x8x8xf32> -> vector<1x8x8xf32>
    "tpu.trace_stop"() : () -> ()
    %cst_9 = arith.constant dense<0xFF800000> : vector<1x8xf32>
    %22 = vector.multi_reduction <maximumf>, %21, %cst_9 [2] : vector<1x8x8xf32> to vector<1x8xf32>
    %23 = vector.shape_cast %22 : vector<1x8xf32> to vector<1x8x1xf32>
    %24 = vector.broadcast %23 : vector<1x8x1xf32> to vector<1x8x8xf32>
    %25 = arith.subf %21, %24 : vector<1x8x8xf32>
    %26 = math.exp %25 : vector<1x8x8xf32>
    %cst_10 = arith.constant dense<0.000000e+00> : vector<1x8xf32>
    %27 = vector.multi_reduction <add>, %26, %cst_10 [2] : vector<1x8x8xf32> to vector<1x8xf32>
    %28 = vector.shape_cast %27 : vector<1x8xf32> to vector<1x8x1xf32>
    %29 = tpu.reciprocal %28 {approx = true} : vector<1x8x1xf32> -> vector<1x8x1xf32>
    %30 = vector.broadcast %29 : vector<1x8x1xf32> to vector<1x8x8xf32>
    %31 = arith.mulf %26, %30 : vector<1x8x8xf32>
    %32 = arith.truncf %31 : vector<1x8x8xf32> to vector<1x8x8xbf16>
    "tpu.trace_start"() <{level = 10 : i32, message = "bqk,bkd->bqd"}> : () -> ()
    %cst_11 = arith.constant dense<0.000000e+00> : vector<1x8x8xf32>
    %33 = tpu.matmul %32, %20, %cst_11 {dimension_numbers = #tpu.dot_dimension_numbers<[2], [1], [1], [2], [0, 0, 0, 1, 1, 2], [0], [0]>} : vector<1x8x8xbf16>, vector<1x8x8xbf16>, vector<1x8x8xf32> -> vector<1x8x8xf32>
    "tpu.trace_stop"() : () -> ()
    %34 = vector.shape_cast %33 : vector<1x8x8xf32> to vector<8x8xf32>
    %35 = vector.extract_strided_slice %11 {offsets = [0, 8], sizes = [8, 8], strides = [1, 1]} : vector<8x96xf32> to vector<8x8xf32>
    %36 = vector.shape_cast %35 : vector<8x8xf32> to vector<1x8x8xf32>
    %37 = arith.truncf %36 : vector<1x8x8xf32> to vector<1x8x8xbf16>
    %38 = vector.extract_strided_slice %11 {offsets = [0, 40], sizes = [8, 8], strides = [1, 1]} : vector<8x96xf32> to vector<8x8xf32>
    %39 = vector.shape_cast %38 : vector<8x8xf32> to vector<1x8x8xf32>
    %40 = arith.truncf %39 : vector<1x8x8xf32> to vector<1x8x8xbf16>
    %41 = vector.extract_strided_slice %11 {offsets = [0, 72], sizes = [8, 8], strides = [1, 1]} : vector<8x96xf32> to vector<8x8xf32>
    %42 = vector.shape_cast %41 : vector<8x8xf32> to vector<1x8x8xf32>
    %43 = arith.truncf %42 : vector<1x8x8xf32> to vector<1x8x8xbf16>
    "tpu.trace_start"() <{level = 10 : i32, message = "bqd,bkd->bqk"}> : () -> ()
    %cst_12 = arith.constant dense<0.000000e+00> : vector<1x8x8xf32>
    %44 = tpu.matmul %37, %40, %cst_12 {dimension_numbers = #tpu.dot_dimension_numbers<[2], [2], [1], [1], [0, 0, 0, 1, 1, 1], [0], [0]>} : vector<1x8x8xbf16>, vector<1x8x8xbf16>, vector<1x8x8xf32> -> vector<1x8x8xf32>
    "tpu.trace_stop"() : () -> ()
    %cst_13 = arith.constant dense<0xFF800000> : vector<1x8xf32>
    %45 = vector.multi_reduction <maximumf>, %44, %cst_13 [2] : vector<1x8x8xf32> to vector<1x8xf32>
    %46 = vector.shape_cast %45 : vector<1x8xf32> to vector<1x8x1xf32>
    %47 = vector.broadcast %46 : vector<1x8x1xf32> to vector<1x8x8xf32>
    %48 = arith.subf %44, %47 : vector<1x8x8xf32>
    %49 = math.exp %48 : vector<1x8x8xf32>
    %cst_14 = arith.constant dense<0.000000e+00> : vector<1x8xf32>
    %50 = vector.multi_reduction <add>, %49, %cst_14 [2] : vector<1x8x8xf32> to vector<1x8xf32>
    %51 = vector.shape_cast %50 : vector<1x8xf32> to vector<1x8x1xf32>
    %52 = tpu.reciprocal %51 {approx = true} : vector<1x8x1xf32> -> vector<1x8x1xf32>
    %53 = vector.broadcast %52 : vector<1x8x1xf32> to vector<1x8x8xf32>
    %54 = arith.mulf %49, %53 : vector<1x8x8xf32>
    %55 = arith.truncf %54 : vector<1x8x8xf32> to vector<1x8x8xbf16>
    "tpu.trace_start"() <{level = 10 : i32, message = "bqk,bkd->bqd"}> : () -> ()
    %cst_15 = arith.constant dense<0.000000e+00> : vector<1x8x8xf32>
    %56 = tpu.matmul %55, %43, %cst_15 {dimension_numbers = #tpu.dot_dimension_numbers<[2], [1], [1], [2], [0, 0, 0, 1, 1, 2], [0], [0]>} : vector<1x8x8xbf16>, vector<1x8x8xbf16>, vector<1x8x8xf32> -> vector<1x8x8xf32>
    "tpu.trace_stop"() : () -> ()
    %57 = vector.shape_cast %56 : vector<1x8x8xf32> to vector<8x8xf32>
    %58 = vector.extract_strided_slice %11 {offsets = [0, 16], sizes = [8, 8], strides = [1, 1]} : vector<8x96xf32> to vector<8x8xf32>
    %59 = vector.shape_cast %58 : vector<8x8xf32> to vector<1x8x8xf32>
    %60 = arith.truncf %59 : vector<1x8x8xf32> to vector<1x8x8xbf16>
    %61 = vector.extract_strided_slice %11 {offsets = [0, 48], sizes = [8, 8], strides = [1, 1]} : vector<8x96xf32> to vector<8x8xf32>
    %62 = vector.shape_cast %61 : vector<8x8xf32> to vector<1x8x8xf32>
    %63 = arith.truncf %62 : vector<1x8x8xf32> to vector<1x8x8xbf16>
    %64 = vector.extract_strided_slice %11 {offsets = [0, 80], sizes = [8, 8], strides = [1, 1]} : vector<8x96xf32> to vector<8x8xf32>
    %65 = vector.shape_cast %64 : vector<8x8xf32> to vector<1x8x8xf32>
    %66 = arith.truncf %65 : vector<1x8x8xf32> to vector<1x8x8xbf16>
    "tpu.trace_start"() <{level = 10 : i32, message = "bqd,bkd->bqk"}> : () -> ()
    %cst_16 = arith.constant dense<0.000000e+00> : vector<1x8x8xf32>
    %67 = tpu.matmul %60, %63, %cst_16 {dimension_numbers = #tpu.dot_dimension_numbers<[2], [2], [1], [1], [0, 0, 0, 1, 1, 1], [0], [0]>} : vector<1x8x8xbf16>, vector<1x8x8xbf16>, vector<1x8x8xf32> -> vector<1x8x8xf32>
    "tpu.trace_stop"() : () -> ()
    %cst_17 = arith.constant dense<0xFF800000> : vector<1x8xf32>
    %68 = vector.multi_reduction <maximumf>, %67, %cst_17 [2] : vector<1x8x8xf32> to vector<1x8xf32>
    %69 = vector.shape_cast %68 : vector<1x8xf32> to vector<1x8x1xf32>
    %70 = vector.broadcast %69 : vector<1x8x1xf32> to vector<1x8x8xf32>
    %71 = arith.subf %67, %70 : vector<1x8x8xf32>
    %72 = math.exp %71 : vector<1x8x8xf32>
    %cst_18 = arith.constant dense<0.000000e+00> : vector<1x8xf32>
    %73 = vector.multi_reduction <add>, %72, %cst_18 [2] : vector<1x8x8xf32> to vector<1x8xf32>
    %74 = vector.shape_cast %73 : vector<1x8xf32> to vector<1x8x1xf32>
    %75 = tpu.reciprocal %74 {approx = true} : vector<1x8x1xf32> -> vector<1x8x1xf32>
    %76 = vector.broadcast %75 : vector<1x8x1xf32> to vector<1x8x8xf32>
    %77 = arith.mulf %72, %76 : vector<1x8x8xf32>
    %78 = arith.truncf %77 : vector<1x8x8xf32> to vector<1x8x8xbf16>
    "tpu.trace_start"() <{level = 10 : i32, message = "bqk,bkd->bqd"}> : () -> ()
    %cst_19 = arith.constant dense<0.000000e+00> : vector<1x8x8xf32>
    %79 = tpu.matmul %78, %66, %cst_19 {dimension_numbers = #tpu.dot_dimension_numbers<[2], [1], [1], [2], [0, 0, 0, 1, 1, 2], [0], [0]>} : vector<1x8x8xbf16>, vector<1x8x8xbf16>, vector<1x8x8xf32> -> vector<1x8x8xf32>
    "tpu.trace_stop"() : () -> ()
    %80 = vector.shape_cast %79 : vector<1x8x8xf32> to vector<8x8xf32>
    %81 = vector.extract_strided_slice %11 {offsets = [0, 24], sizes = [8, 8], strides = [1, 1]} : vector<8x96xf32> to vector<8x8xf32>
    %82 = vector.shape_cast %81 : vector<8x8xf32> to vector<1x8x8xf32>
    %83 = arith.truncf %82 : vector<1x8x8xf32> to vector<1x8x8xbf16>
    %84 = vector.extract_strided_slice %11 {offsets = [0, 56], sizes = [8, 8], strides = [1, 1]} : vector<8x96xf32> to vector<8x8xf32>
    %85 = vector.shape_cast %84 : vector<8x8xf32> to vector<1x8x8xf32>
    %86 = arith.truncf %85 : vector<1x8x8xf32> to vector<1x8x8xbf16>
    %87 = vector.extract_strided_slice %11 {offsets = [0, 88], sizes = [8, 8], strides = [1, 1]} : vector<8x96xf32> to vector<8x8xf32>
    %88 = vector.shape_cast %87 : vector<8x8xf32> to vector<1x8x8xf32>
    %89 = arith.truncf %88 : vector<1x8x8xf32> to vector<1x8x8xbf16>
    "tpu.trace_start"() <{level = 10 : i32, message = "bqd,bkd->bqk"}> : () -> ()
    %cst_20 = arith.constant dense<0.000000e+00> : vector<1x8x8xf32>
    %90 = tpu.matmul %83, %86, %cst_20 {dimension_numbers = #tpu.dot_dimension_numbers<[2], [2], [1], [1], [0, 0, 0, 1, 1, 1], [0], [0]>} : vector<1x8x8xbf16>, vector<1x8x8xbf16>, vector<1x8x8xf32> -> vector<1x8x8xf32>
    "tpu.trace_stop"() : () -> ()
    %cst_21 = arith.constant dense<0xFF800000> : vector<1x8xf32>
    %91 = vector.multi_reduction <maximumf>, %90, %cst_21 [2] : vector<1x8x8xf32> to vector<1x8xf32>
    %92 = vector.shape_cast %91 : vector<1x8xf32> to vector<1x8x1xf32>
    %93 = vector.broadcast %92 : vector<1x8x1xf32> to vector<1x8x8xf32>
    %94 = arith.subf %90, %93 : vector<1x8x8xf32>
    %95 = math.exp %94 : vector<1x8x8xf32>
    %cst_22 = arith.constant dense<0.000000e+00> : vector<1x8xf32>
    %96 = vector.multi_reduction <add>, %95, %cst_22 [2] : vector<1x8x8xf32> to vector<1x8xf32>
    %97 = vector.shape_cast %96 : vector<1x8xf32> to vector<1x8x1xf32>
    %98 = tpu.reciprocal %97 {approx = true} : vector<1x8x1xf32> -> vector<1x8x1xf32>
    %99 = vector.broadcast %98 : vector<1x8x1xf32> to vector<1x8x8xf32>
    %100 = arith.mulf %95, %99 : vector<1x8x8xf32>
    %101 = arith.truncf %100 : vector<1x8x8xf32> to vector<1x8x8xbf16>
    "tpu.trace_start"() <{level = 10 : i32, message = "bqk,bkd->bqd"}> : () -> ()
    %cst_23 = arith.constant dense<0.000000e+00> : vector<1x8x8xf32>
    %102 = tpu.matmul %101, %89, %cst_23 {dimension_numbers = #tpu.dot_dimension_numbers<[2], [1], [1], [2], [0, 0, 0, 1, 1, 2], [0], [0]>} : vector<1x8x8xbf16>, vector<1x8x8xbf16>, vector<1x8x8xf32> -> vector<1x8x8xf32>
    "tpu.trace_stop"() : () -> ()
    %103 = vector.shape_cast %102 : vector<1x8x8xf32> to vector<8x8xf32>
    %104 = tpu.concatenate %34, %57, %80, %103 in 1 : vector<8x8xf32>, vector<8x8xf32>, vector<8x8xf32>, vector<8x8xf32> -> vector<8x32xf32>
    %105 = arith.truncf %104 : vector<8x32xf32> to vector<8x32xbf16>
    %c0_24 = arith.constant 0 : index
    %c0_25 = arith.constant 0 : index
    %c0_26 = arith.constant 0 : index
    %106 = vector.load %arg5[%c0_24, %c0_25, %c0_26] : memref<1x32x32xbf16, #tpu.memory_space<vmem>>, vector<1x32x32xbf16>
    %107 = vector.shape_cast %106 : vector<1x32x32xbf16> to vector<32x32xbf16>
    %cst_27 = arith.constant dense<0.000000e+00> : vector<8x32xf32>
    %108 = tpu.matmul %105, %107, %cst_27 {dimension_numbers = #tpu.dot_dimension_numbers<[1], [0], [0], [1], [0, 0, 1, 1], [], []>} : vector<8x32xbf16>, vector<32x32xbf16>, vector<8x32xf32> -> vector<8x32xf32>
    %c0_28 = arith.constant 0 : index
    %c0_29 = arith.constant 0 : index
    %c0_30 = arith.constant 0 : index
    %109 = vector.load %arg6[%c0_28, %c0_29, %c0_30] : memref<1x1x32xf32, #tpu.memory_space<vmem>>, vector<1x1x32xf32>
    %110 = vector.shape_cast %109 : vector<1x1x32xf32> to vector<1x32xf32>
    %111 = vector.broadcast %110 : vector<1x32xf32> to vector<8x32xf32>
    %112 = arith.addf %108, %111 : vector<8x32xf32>
    %113 = arith.addf %3, %112 : vector<8x32xf32>
    %c0_31 = arith.constant 0 : index
    %c0_32 = arith.constant 0 : index
    %c0_33 = arith.constant 0 : index
    %114 = vector.load %arg7[%c0_31, %c0_32, %c0_33] : memref<1x1x32xf32, #tpu.memory_space<vmem>>, vector<1x1x32xf32>
    %115 = vector.shape_cast %114 : vector<1x1x32xf32> to vector<1x32xf32>
    %c0_34 = arith.constant 0 : index
    %c0_35 = arith.constant 0 : index
    %c0_36 = arith.constant 0 : index
    %116 = vector.load %arg8[%c0_34, %c0_35, %c0_36] : memref<1x1x32xf32, #tpu.memory_space<vmem>>, vector<1x1x32xf32>
    %117 = vector.shape_cast %116 : vector<1x1x32xf32> to vector<1x32xf32>
    %cst_37 = arith.constant dense<0.000000e+00> : vector<8xf32>
    %118 = vector.multi_reduction <add>, %113, %cst_37 [1] : vector<8x32xf32> to vector<8xf32>
    %119 = vector.shape_cast %118 : vector<8xf32> to vector<8x1xf32>
    %cst_38 = arith.constant 3.200000e+01 : f32
    %120 = vector.broadcast %cst_38 : f32 to vector<8x1xf32>
    %121 = arith.divf %119, %120 : vector<8x1xf32>
    %122 = vector.broadcast %121 : vector<8x1xf32> to vector<8x32xf32>
    %123 = arith.subf %113, %122 : vector<8x32xf32>
    %124 = arith.mulf %123, %123 : vector<8x32xf32>
    %cst_39 = arith.constant dense<0.000000e+00> : vector<8xf32>
    %125 = vector.multi_reduction <add>, %124, %cst_39 [1] : vector<8x32xf32> to vector<8xf32>
    %126 = vector.shape_cast %125 : vector<8xf32> to vector<8x1xf32>
    %cst_40 = arith.constant 3.200000e+01 : f32
    %127 = vector.broadcast %cst_40 : f32 to vector<8x1xf32>
    %128 = arith.divf %126, %127 : vector<8x1xf32>
    %129 = vector.broadcast %121 : vector<8x1xf32> to vector<8x32xf32>
    %130 = arith.subf %113, %129 : vector<8x32xf32>
    %cst_41 = arith.constant 9.99999974E-6 : f32
    %131 = vector.broadcast %cst_41 : f32 to vector<8x1xf32>
    %132 = arith.addf %128, %131 : vector<8x1xf32>
    %133 = math.rsqrt %132 : vector<8x1xf32>
    %134 = vector.broadcast %133 : vector<8x1xf32> to vector<8x32xf32>
    %135 = arith.mulf %130, %134 : vector<8x32xf32>
    %136 = vector.broadcast %115 : vector<1x32xf32> to vector<8x32xf32>
    %137 = arith.mulf %135, %136 : vector<8x32xf32>
    %138 = vector.broadcast %117 : vector<1x32xf32> to vector<8x32xf32>
    %139 = arith.addf %137, %138 : vector<8x32xf32>
    %140 = arith.truncf %139 : vector<8x32xf32> to vector<8x32xbf16>
    %c0_42 = arith.constant 0 : index
    %c0_43 = arith.constant 0 : index
    %c0_44 = arith.constant 0 : index
    %141 = vector.load %arg11[%c0_42, %c0_43, %c0_44] : memref<1x32x64xbf16, #tpu.memory_space<vmem>>, vector<1x32x64xbf16>
    %142 = vector.shape_cast %141 : vector<1x32x64xbf16> to vector<32x64xbf16>
    %cst_45 = arith.constant dense<0.000000e+00> : vector<8x64xf32>
    %143 = tpu.matmul %140, %142, %cst_45 {dimension_numbers = #tpu.dot_dimension_numbers<[1], [0], [0], [1], [0, 0, 1, 1], [], []>} : vector<8x32xbf16>, vector<32x64xbf16>, vector<8x64xf32> -> vector<8x64xf32>
    %c0_46 = arith.constant 0 : index
    %c0_47 = arith.constant 0 : index
    %c0_48 = arith.constant 0 : index
    %144 = vector.load %arg12[%c0_46, %c0_47, %c0_48] : memref<1x1x64xf32, #tpu.memory_space<vmem>>, vector<1x1x64xf32>
    %145 = vector.shape_cast %144 : vector<1x1x64xf32> to vector<1x64xf32>
    %146 = vector.broadcast %145 : vector<1x64xf32> to vector<8x64xf32>
    %147 = arith.addf %143, %146 : vector<8x64xf32>
    %cst_49 = arith.constant 0.000000e+00 : f32
    %148 = vector.broadcast %cst_49 : f32 to vector<8x64xf32>
    %149 = arith.maximumf %147, %148 : vector<8x64xf32>
    %150 = arith.truncf %149 : vector<8x64xf32> to vector<8x64xbf16>
    %c0_50 = arith.constant 0 : index
    %c0_51 = arith.constant 0 : index
    %c0_52 = arith.constant 0 : index
    %151 = vector.load %arg13[%c0_50, %c0_51, %c0_52] : memref<1x64x32xbf16, #tpu.memory_space<vmem>>, vector<1x64x32xbf16>
    %152 = vector.shape_cast %151 : vector<1x64x32xbf16> to vector<64x32xbf16>
    %cst_53 = arith.constant dense<0.000000e+00> : vector<8x32xf32>
    %153 = tpu.matmul %150, %152, %cst_53 {dimension_numbers = #tpu.dot_dimension_numbers<[1], [0], [0], [1], [0, 0, 1, 1], [], []>} : vector<8x64xbf16>, vector<64x32xbf16>, vector<8x32xf32> -> vector<8x32xf32>
    %c0_54 = arith.constant 0 : index
    %c0_55 = arith.constant 0 : index
    %c0_56 = arith.constant 0 : index
    %154 = vector.load %arg14[%c0_54, %c0_55, %c0_56] : memref<1x1x32xf32, #tpu.memory_space<vmem>>, vector<1x1x32xf32>
    %155 = vector.shape_cast %154 : vector<1x1x32xf32> to vector<1x32xf32>
    %156 = vector.broadcast %155 : vector<1x32xf32> to vector<8x32xf32>
    %157 = arith.addf %153, %156 : vector<8x32xf32>
    %158 = arith.addf %139, %157 : vector<8x32xf32>
    %c0_57 = arith.constant 0 : index
    %c0_58 = arith.constant 0 : index
    %c0_59 = arith.constant 0 : index
    %159 = vector.load %arg9[%c0_57, %c0_58, %c0_59] : memref<1x1x32xf32, #tpu.memory_space<vmem>>, vector<1x1x32xf32>
    %160 = vector.shape_cast %159 : vector<1x1x32xf32> to vector<1x32xf32>
    %c0_60 = arith.constant 0 : index
    %c0_61 = arith.constant 0 : index
    %c0_62 = arith.constant 0 : index
    %161 = vector.load %arg10[%c0_60, %c0_61, %c0_62] : memref<1x1x32xf32, #tpu.memory_space<vmem>>, vector<1x1x32xf32>
    %162 = vector.shape_cast %161 : vector<1x1x32xf32> to vector<1x32xf32>
    %cst_63 = arith.constant dense<0.000000e+00> : vector<8xf32>
    %163 = vector.multi_reduction <add>, %158, %cst_63 [1] : vector<8x32xf32> to vector<8xf32>
    %164 = vector.shape_cast %163 : vector<8xf32> to vector<8x1xf32>
    %cst_64 = arith.constant 3.200000e+01 : f32
    %165 = vector.broadcast %cst_64 : f32 to vector<8x1xf32>
    %166 = arith.divf %164, %165 : vector<8x1xf32>
    %167 = vector.broadcast %166 : vector<8x1xf32> to vector<8x32xf32>
    %168 = arith.subf %158, %167 : vector<8x32xf32>
    %169 = arith.mulf %168, %168 : vector<8x32xf32>
    %cst_65 = arith.constant dense<0.000000e+00> : vector<8xf32>
    %170 = vector.multi_reduction <add>, %169, %cst_65 [1] : vector<8x32xf32> to vector<8xf32>
    %171 = vector.shape_cast %170 : vector<8xf32> to vector<8x1xf32>
    %cst_66 = arith.constant 3.200000e+01 : f32
    %172 = vector.broadcast %cst_66 : f32 to vector<8x1xf32>
    %173 = arith.divf %171, %172 : vector<8x1xf32>
    %174 = vector.broadcast %166 : vector<8x1xf32> to vector<8x32xf32>
    %175 = arith.subf %158, %174 : vector<8x32xf32>
    %cst_67 = arith.constant 9.99999974E-6 : f32
    %176 = vector.broadcast %cst_67 : f32 to vector<8x1xf32>
    %177 = arith.addf %173, %176 : vector<8x1xf32>
    %178 = math.rsqrt %177 : vector<8x1xf32>
    %179 = vector.broadcast %178 : vector<8x1xf32> to vector<8x32xf32>
    %180 = arith.mulf %175, %179 : vector<8x32xf32>
    %181 = vector.broadcast %160 : vector<1x32xf32> to vector<8x32xf32>
    %182 = arith.mulf %180, %181 : vector<8x32xf32>
    %183 = vector.broadcast %162 : vector<1x32xf32> to vector<8x32xf32>
    %184 = arith.addf %182, %183 : vector<8x32xf32>
    %c0_68 = arith.constant 0 : index
    %c0_69 = arith.constant 0 : index
    %185 = vector.load %arg22[%c0_68, %c0_69] : memref<8x32xf32, #tpu.memory_space<vmem>>, vector<8x32xf32>
    tpu.vector_store %arg22[%c0_68, %c0_69], %184 {strides = array<i32>} : memref<8x32xf32, #tpu.memory_space<vmem>>, vector<8x32xf32>,
    %c1_i32 = arith.constant 1 : i32
    %186 = arith.cmpi eq, %arg1, %c1_i32 : i32
    %187 = arith.extui %186 : i1 to i32
    %c0_i32_70 = arith.constant 0 : i32
    %188 = arith.cmpi ne, %187, %c0_i32_70 : i32
    scf.if %188 {
      %c0_71 = arith.constant 0 : index
      %c0_72 = arith.constant 0 : index
      %189 = vector.load %arg15[%c0_71, %c0_72] : memref<1x32xf32, #tpu.memory_space<vmem>>, vector<1x32xf32>
      %c0_73 = arith.constant 0 : index
      %c0_74 = arith.constant 0 : index
      %190 = vector.load %arg16[%c0_73, %c0_74] : memref<1x32xf32, #tpu.memory_space<vmem>>, vector<1x32xf32>
      %cst_75 = arith.constant dense<0.000000e+00> : vector<8xf32>
      %191 = vector.multi_reduction <add>, %184, %cst_75 [1] : vector<8x32xf32> to vector<8xf32>
      %192 = vector.shape_cast %191 : vector<8xf32> to vector<8x1xf32>
      %cst_76 = arith.constant 3.200000e+01 : f32
      %193 = vector.broadcast %cst_76 : f32 to vector<8x1xf32>
      %194 = arith.divf %192, %193 : vector<8x1xf32>
      %195 = vector.broadcast %194 : vector<8x1xf32> to vector<8x32xf32>
      %196 = arith.subf %184, %195 : vector<8x32xf32>
      %197 = arith.mulf %196, %196 : vector<8x32xf32>
      %cst_77 = arith.constant dense<0.000000e+00> : vector<8xf32>
      %198 = vector.multi_reduction <add>, %197, %cst_77 [1] : vector<8x32xf32> to vector<8xf32>
      %199 = vector.shape_cast %198 : vector<8xf32> to vector<8x1xf32>
      %cst_78 = arith.constant 3.200000e+01 : f32
      %200 = vector.broadcast %cst_78 : f32 to vector<8x1xf32>
      %201 = arith.divf %199, %200 : vector<8x1xf32>
      %202 = vector.broadcast %194 : vector<8x1xf32> to vector<8x32xf32>
      %203 = arith.subf %184, %202 : vector<8x32xf32>
      %cst_79 = arith.constant 9.99999974E-6 : f32
      %204 = vector.broadcast %cst_79 : f32 to vector<8x1xf32>
      %205 = arith.addf %201, %204 : vector<8x1xf32>
      %206 = math.rsqrt %205 : vector<8x1xf32>
      %207 = vector.broadcast %206 : vector<8x1xf32> to vector<8x32xf32>
      %208 = arith.mulf %203, %207 : vector<8x32xf32>
      %209 = vector.broadcast %189 : vector<1x32xf32> to vector<8x32xf32>
      %210 = arith.mulf %208, %209 : vector<8x32xf32>
      %211 = vector.broadcast %190 : vector<1x32xf32> to vector<8x32xf32>
      %212 = arith.addf %210, %211 : vector<8x32xf32>
      %213 = vector.shape_cast %212 : vector<8x32xf32> to vector<1x8x32xf32>
      %cst_80 = arith.constant dense<0xFF800000> : vector<1x32xf32>
      %214 = vector.multi_reduction <maximumf>, %213, %cst_80 [1] : vector<1x8x32xf32> to vector<1x32xf32>
      %215 = arith.truncf %214 : vector<1x32xf32> to vector<1x32xbf16>
      %c0_81 = arith.constant 0 : index
      %c0_82 = arith.constant 0 : index
      %216 = vector.load %arg17[%c0_81, %c0_82] : memref<32x64xbf16, #tpu.memory_space<vmem>>, vector<32x64xbf16>
      %cst_83 = arith.constant dense<0.000000e+00> : vector<1x64xf32>
      %217 = tpu.matmul %215, %216, %cst_83 {dimension_numbers = #tpu.dot_dimension_numbers<[1], [0], [0], [1], [0, 0, 1, 1], [], []>} : vector<1x32xbf16>, vector<32x64xbf16>, vector<1x64xf32> -> vector<1x64xf32>
      %c0_84 = arith.constant 0 : index
      %c0_85 = arith.constant 0 : index
      %218 = vector.load %arg18[%c0_84, %c0_85] : memref<1x64xf32, #tpu.memory_space<vmem>>, vector<1x64xf32>
      %219 = arith.addf %217, %218 : vector<1x64xf32>
      %cst_86 = arith.constant 0.000000e+00 : f32
      %220 = vector.broadcast %cst_86 : f32 to vector<1x64xf32>
      %221 = arith.maximumf %219, %220 : vector<1x64xf32>
      %c0_87 = arith.constant 0 : index
      %c0_88 = arith.constant 0 : index
      %222 = vector.load %arg19[%c0_87, %c0_88] : memref<1x64xf32, #tpu.memory_space<vmem>>, vector<1x64xf32>
      %223 = arith.mulf %221, %222 : vector<1x64xf32>
      %cst_89 = arith.constant dense<0.000000e+00> : vector<1xf32>
      %224 = vector.multi_reduction <add>, %223, %cst_89 [1] : vector<1x64xf32> to vector<1xf32>
      %225 = vector.shape_cast %224 : vector<1xf32> to vector<1x1xf32>
      %c0_90 = arith.constant 0 : index
      %c0_91 = arith.constant 0 : index
      %226 = vector.load %arg20[%c0_90, %c0_91] : memref<1x1xf32, #tpu.memory_space<vmem>>, vector<1x1xf32>
      %227 = arith.addf %225, %226 : vector<1x1xf32>
      %228 = vector.shape_cast %227 : vector<1x1xf32> to vector<1x1x1xf32>
      %c0_92 = arith.constant 0 : index
      %c0_93 = arith.constant 0 : index
      %c0_94 = arith.constant 0 : index
      %229 = vector.load %arg21[%c0_92, %c0_93, %c0_94] : memref<1x1x1xf32, #tpu.memory_space<vmem>>, vector<1x1x1xf32>
      tpu.vector_store %arg21[%c0_92, %c0_93, %c0_94], %228 {strides = array<i32>} : memref<1x1x1xf32, #tpu.memory_space<vmem>>, vector<1x1x1xf32>,
    } else {
    }
    return
  }
  func.func @transform_0(%arg0: i32, %arg1: i32) -> (i32, i32, i32) {
    %c0_i32 = arith.constant 0 : i32
    %c0_i32_0 = arith.constant 0 : i32
    %c0_i32_1 = arith.constant 0 : i32
    return %arg0, %c0_i32, %c0_i32_0 : i32, i32, i32
  }
  func.func @transform_1(%arg0: i32, %arg1: i32) -> (i32, i32, i32) {
    %c0_i32 = arith.constant 0 : i32
    %c0_i32_0 = arith.constant 0 : i32
    %c0_i32_1 = arith.constant 0 : i32
    return %arg1, %c0_i32, %c0_i32_0 : i32, i32, i32
  }
  func.func @transform_2(%arg0: i32, %arg1: i32) -> (i32, i32, i32) {
    %c0_i32 = arith.constant 0 : i32
    %c0_i32_0 = arith.constant 0 : i32
    %c0_i32_1 = arith.constant 0 : i32
    return %arg1, %c0_i32, %c0_i32_0 : i32, i32, i32
  }
  func.func @transform_3(%arg0: i32, %arg1: i32) -> (i32, i32, i32) {
    %c0_i32 = arith.constant 0 : i32
    %c0_i32_0 = arith.constant 0 : i32
    %c0_i32_1 = arith.constant 0 : i32
    return %arg1, %c0_i32, %c0_i32_0 : i32, i32, i32
  }
  func.func @transform_4(%arg0: i32, %arg1: i32) -> (i32, i32, i32) {
    %c0_i32 = arith.constant 0 : i32
    %c0_i32_0 = arith.constant 0 : i32
    %c0_i32_1 = arith.constant 0 : i32
    return %arg1, %c0_i32, %c0_i32_0 : i32, i32, i32
  }
  func.func @transform_5(%arg0: i32, %arg1: i32) -> (i32, i32, i32) {
    %c0_i32 = arith.constant 0 : i32
    %c0_i32_0 = arith.constant 0 : i32
    %c0_i32_1 = arith.constant 0 : i32
    return %arg1, %c0_i32, %c0_i32_0 : i32, i32, i32
  }
  func.func @transform_6(%arg0: i32, %arg1: i32) -> (i32, i32, i32) {
    %c0_i32 = arith.constant 0 : i32
    %c0_i32_0 = arith.constant 0 : i32
    %c0_i32_1 = arith.constant 0 : i32
    return %arg1, %c0_i32, %c0_i32_0 : i32, i32, i32
  }
  func.func @transform_7(%arg0: i32, %arg1: i32) -> (i32, i32, i32) {
    %c0_i32 = arith.constant 0 : i32
    %c0_i32_0 = arith.constant 0 : i32
    %c0_i32_1 = arith.constant 0 : i32
    return %arg1, %c0_i32, %c0_i32_0 : i32, i32, i32
  }
  func.func @transform_8(%arg0: i32, %arg1: i32) -> (i32, i32, i32) {
    %c0_i32 = arith.constant 0 : i32
    %c0_i32_0 = arith.constant 0 : i32
    %c0_i32_1 = arith.constant 0 : i32
    return %arg1, %c0_i32, %c0_i32_0 : i32, i32, i32
  }
  func.func @transform_9(%arg0: i32, %arg1: i32) -> (i32, i32, i32) {
    %c0_i32 = arith.constant 0 : i32
    %c0_i32_0 = arith.constant 0 : i32
    %c0_i32_1 = arith.constant 0 : i32
    return %arg1, %c0_i32, %c0_i32_0 : i32, i32, i32
  }
  func.func @transform_10(%arg0: i32, %arg1: i32) -> (i32, i32, i32) {
    %c0_i32 = arith.constant 0 : i32
    %c0_i32_0 = arith.constant 0 : i32
    %c0_i32_1 = arith.constant 0 : i32
    return %arg1, %c0_i32, %c0_i32_0 : i32, i32, i32
  }
  func.func @transform_11(%arg0: i32, %arg1: i32) -> (i32, i32, i32) {
    %c0_i32 = arith.constant 0 : i32
    %c0_i32_0 = arith.constant 0 : i32
    %c0_i32_1 = arith.constant 0 : i32
    return %arg1, %c0_i32, %c0_i32_0 : i32, i32, i32
  }
  func.func @transform_12(%arg0: i32, %arg1: i32) -> (i32, i32, i32) {
    %c0_i32 = arith.constant 0 : i32
    %c0_i32_0 = arith.constant 0 : i32
    %c0_i32_1 = arith.constant 0 : i32
    return %arg1, %c0_i32, %c0_i32_0 : i32, i32, i32
  }
  func.func @transform_13(%arg0: i32, %arg1: i32) -> (i32, i32) {
    %c0_i32 = arith.constant 0 : i32
    %c0_i32_0 = arith.constant 0 : i32
    %c0_i32_1 = arith.constant 0 : i32
    return %c0_i32, %c0_i32_0 : i32, i32
  }
  func.func @transform_14(%arg0: i32, %arg1: i32) -> (i32, i32) {
    %c0_i32 = arith.constant 0 : i32
    %c0_i32_0 = arith.constant 0 : i32
    %c0_i32_1 = arith.constant 0 : i32
    return %c0_i32, %c0_i32_0 : i32, i32
  }
  func.func @transform_15(%arg0: i32, %arg1: i32) -> (i32, i32) {
    %c0_i32 = arith.constant 0 : i32
    %c0_i32_0 = arith.constant 0 : i32
    %c0_i32_1 = arith.constant 0 : i32
    return %c0_i32, %c0_i32_0 : i32, i32
  }
  func.func @transform_16(%arg0: i32, %arg1: i32) -> (i32, i32) {
    %c0_i32 = arith.constant 0 : i32
    %c0_i32_0 = arith.constant 0 : i32
    %c0_i32_1 = arith.constant 0 : i32
    return %c0_i32, %c0_i32_0 : i32, i32
  }
  func.func @transform_17(%arg0: i32, %arg1: i32) -> (i32, i32) {
    %c0_i32 = arith.constant 0 : i32
    %c0_i32_0 = arith.constant 0 : i32
    %c0_i32_1 = arith.constant 0 : i32
    return %c0_i32, %c0_i32_0 : i32, i32
  }
  func.func @transform_18(%arg0: i32, %arg1: i32) -> (i32, i32) {
    %c0_i32 = arith.constant 0 : i32
    %c0_i32_0 = arith.constant 0 : i32
    %c0_i32_1 = arith.constant 0 : i32
    return %c0_i32, %c0_i32_0 : i32, i32
  }
  func.func @transform_19(%arg0: i32, %arg1: i32) -> (i32, i32, i32) {
    %c0_i32 = arith.constant 0 : i32
    %c0_i32_0 = arith.constant 0 : i32
    %c0_i32_1 = arith.constant 0 : i32
    return %arg0, %c0_i32, %c0_i32_0 : i32, i32, i32
  }
}

</mosaic_0001>

<llo_original>
// kernel: stp_forward.1
$region0: #{stp_forward.1}
  #allocation0 [shape = 'u32[]', space=smem, size = 0x4, offset = 0x4, fixed_abs, tag = 'smem constant byte address 0x4 - core index']
  #allocation1 [shape = 'u32[144,128]{1,0:T(1,128)}', space=vmem, size = 0x12000, scoped, tag = 'internal scratch']
  #allocation2 [shape = 'f32[8,32]{1,0:T(8,128)}', space=vmem, size = 0x1000, scoped, tag = 'scratch operand']
  #allocation3 [shape = 'f32[1,1]{1,0:T(1,128)S(1)}', space=vmem, size = 0x200, scoped, tag = 'scoped memory for stp_forward.1']
  %s0 = inlined_call_operand.vmem [shape: f32[2,8,32], index: 0, kind: input, shape index: {}]
  %s1 = inlined_call_operand.vmem [shape: bf16[2,32,96], index: 1, kind: input, shape index: {}]
  %s2 = inlined_call_operand.vmem [shape: f32[2,1,96], index: 2, kind: input, shape index: {}]
  %s3 = inlined_call_operand.vmem [shape: bf16[2,32,32], index: 3, kind: input, shape index: {}]
  %s4 = inlined_call_operand.vmem [shape: f32[2,1,32], index: 4, kind: input, shape index: {}]
  %s5 = inlined_call_operand.vmem [shape: f32[2,1,32], index: 5, kind: input, shape index: {}]
  %s6 = inlined_call_operand.vmem [shape: f32[2,1,32], index: 6, kind: input, shape index: {}]
  %s7 = inlined_call_operand.vmem [shape: f32[2,1,32], index: 7, kind: input, shape index: {}]
  %s8 = inlined_call_operand.vmem [shape: f32[2,1,32], index: 8, kind: input, shape index: {}]
  %s9 = inlined_call_operand.vmem [shape: bf16[2,32,64], index: 9, kind: input, shape index: {}]
  %s10 = inlined_call_operand.vmem [shape: f32[2,1,64], index: 10, kind: input, shape index: {}]
  %s11 = inlined_call_operand.vmem [shape: bf16[2,64,32], index: 11, kind: input, shape index: {}]
  %s12 = inlined_call_operand.vmem [shape: f32[2,1,32], index: 12, kind: input, shape index: {}]
  %s13 = inlined_call_operand.vmem [shape: f32[1,32], index: 13, kind: input, shape index: {}]
  %s14 = inlined_call_operand.vmem [shape: f32[1,32], index: 14, kind: input, shape index: {}]
  %s15 = inlined_call_operand.vmem [shape: bf16[32,64], index: 15, kind: input, shape index: {}]
  %s16 = inlined_call_operand.vmem [shape: f32[1,64], index: 16, kind: input, shape index: {}]
  %s17 = inlined_call_operand.vmem [shape: f32[1,64], index: 17, kind: input, shape index: {}]
  %s18 = inlined_call_operand.<no memory space> [shape: f32[1,1], index: 18, kind: input, shape index: {}]
  %s19 = inlined_call_operand.vmem [shape: f32[2,1,1], index: 19, kind: output, shape index: {}]
  %s20 = sld [smem:[#allocation0]]
  $region117: #{stp_forward.1} parent=0
    _
  %s22 = ssub.s32 1, %s20
  %s23 = scalar_select 0, %s22, %s20
  %v24 = vstv %s18
  %25 = vst [vmem:[#allocation3] sm:$0x1] %v24
  loop: start=0, step=1, limit=6
  $region2: #{stp_forward.1} parent=0 // loop_pre_header
    _
  $region3: #{stp_forward.1} parent=0 // loop_header
    %s27 = sphi 0, %s31
    %p28 = scmp.ge.s32.totalorder %s27, 6
    %s34 = sphi 0, %s46
    %s35 = sphi 0, %s42
    %s36 = sphi 0, %s34
    %s37 = sphi 0, %s35
    %s38 = sphi 0, %s36
    %s39 = sphi 0, %s37
    %s49 = sphi 0, %s51
    %s52 = sphi 0, %s49
    %s53 = sphi 0, %s52
    %s69 = sphi 0, %s53
    %s75 = sphi 0, %s77
    %s78 = sphi 0, %s75
    %s79 = sphi 0, %s78
    %s95 = sphi 0, %s79
    %s101 = sphi 0, %s103
    %s104 = sphi 0, %s101
    %s105 = sphi 0, %s104
    %s121 = sphi 0, %s105
    %s127 = sphi 0, %s129
    %s130 = sphi 0, %s127
    %s131 = sphi 0, %s130
    %s147 = sphi 0, %s131
    %s153 = sphi 0, %s155
    %s156 = sphi 0, %s153
    %s157 = sphi 0, %s156
    %s173 = sphi 0, %s157
    %s179 = sphi 0, %s181
    %s182 = sphi 0, %s179
    %s183 = sphi 0, %s182
    %s199 = sphi 0, %s183
    %s205 = sphi 0, %s207
    %s208 = sphi 0, %s205
    %s209 = sphi 0, %s208
    %s225 = sphi 0, %s209
    %s231 = sphi 0, %s233
    %s234 = sphi 0, %s231
    %s235 = sphi 0, %s234
    %s251 = sphi 0, %s235
    %s257 = sphi 0, %s259
    %s260 = sphi 0, %s257
    %s261 = sphi 0, %s260
    %s277 = sphi 0, %s261
    %s283 = sphi 0, %s285
    %s286 = sphi 0, %s283
    %s287 = sphi 0, %s286
    %s303 = sphi 0, %s287
    %s309 = sphi 0, %s311
    %s312 = sphi 0, %s309
    %s313 = sphi 0, %s312
    %s329 = sphi 0, %s313
    %s335 = sphi 0, %s337
    %s338 = sphi 0, %s335
    %s339 = sphi 0, %s338
    %s355 = sphi 0, %s339
    %s361 = sphi 0, %s363
    %s364 = sphi 0, %s361
    %s365 = sphi 0, %s364
    %s381 = sphi 0, %s365
    %s385 = sphi 0, %s385
    %s387 = sphi 0, %s385
    %s388 = sphi 0, %s387
    %s402 = sphi 0, %s388
    %s406 = sphi 0, %s406
    %s408 = sphi 0, %s406
    %s409 = sphi 0, %s408
    %s423 = sphi 0, %s409
    %s427 = sphi 0, %s427
    %s429 = sphi 0, %s427
    %s430 = sphi 0, %s429
    %s444 = sphi 0, %s430
    %s448 = sphi 0, %s448
    %s450 = sphi 0, %s448
    %s451 = sphi 0, %s450
    %s465 = sphi 0, %s451
    %s469 = sphi 0, %s469
    %s471 = sphi 0, %s469
    %s472 = sphi 0, %s471
    %s486 = sphi 0, %s472
    %s490 = sphi 0, %s490
    %s492 = sphi 0, %s490
    %s493 = sphi 0, %s492
    %s507 = sphi 0, %s493
    %s513 = sphi 0, %s515
    %s516 = sphi 0, %s513
    %s517 = sphi 0, %s516
    %s533 = sphi 0, %s517
  $region4: #{stp_forward.1} parent=0 // loop_header_branch
    %30 = sbr.rel (%p28) target = $region8
  $region5: #{stp_forward.1} parent=0 // loop_body
    %s32 = ssub.s32 %s27, 1
    %s33 = ssub.s32 %s27, 2
    %s40 = sadd.s32 1, %s35
    %p41 = scmp.ge.s32.totalorder %s40, 2
    %s42 = scalar_select %p41, 0, %s40
    %s43 = sadd.s32 1, %s34
    %s44 = scalar_select %p41, %s43, %s34
    %p45 = scmp.ge.s32.totalorder %s44, 2
    %s46 = scalar_select %p45, 0, %s44
    %s47 = ssub.s32 %s34, %s46
    %p48 = scmp.eq.s32.totalorder %s47, 0
    %s50 = sadd.s32 %s49, 1
    %s51 = scalar_select %p48, %s49, %s50
    %p54 = pneg %p48
    %p55 = scmp.eq.s32.totalorder %s27, 3
    %p56 = por %p54, %p55
    %p57 = scmp.ne.s32.totalorder %s49, %s52
    %p58 = scmp.eq.s32.totalorder %s27, 0
    %p59 = por %p57, %p58
    %p60 = scmp.ne.s32.totalorder %s49, %s52
    %p61 = scmp.eq.s32.totalorder %s32, 3
    %p62 = por %p60, %p61
    %p63 = scmp.ne.s32.totalorder %s52, %s53
    %p64 = scmp.eq.s32.totalorder %s32, 0
    %p65 = por %p63, %p64
    %p66 = scmp.ne.s32.totalorder %s52, %s53
    %p67 = scmp.eq.s32.totalorder %s33, 3
    %p68 = por %p66, %p67
    %p70 = scmp.ne.s32.totalorder %s53, %s69
    %p71 = scmp.eq.s32.totalorder %s33, 0
    %p72 = por %p70, %p71
    %s73 = ssub.s32 %s35, %s42
    %p74 = scmp.eq.s32.totalorder %s73, 0
    %s76 = sadd.s32 %s75, 1
    %s77 = scalar_select %p74, %s75, %s76
    %p80 = pneg %p74
    %p81 = scmp.eq.s32.totalorder %s27, 3
    %p82 = por %p80, %p81
    %p83 = scmp.ne.s32.totalorder %s75, %s78
    %p84 = scmp.eq.s32.totalorder %s27, 0
    %p85 = por %p83, %p84
    %p86 = scmp.ne.s32.totalorder %s75, %s78
    %p87 = scmp.eq.s32.totalorder %s32, 3
    %p88 = por %p86, %p87
    %p89 = scmp.ne.s32.totalorder %s78, %s79
    %p90 = scmp.eq.s32.totalorder %s32, 0
    %p91 = por %p89, %p90
    %p92 = scmp.ne.s32.totalorder %s78, %s79
    %p93 = scmp.eq.s32.totalorder %s33, 3
    %p94 = por %p92, %p93
    %p96 = scmp.ne.s32.totalorder %s79, %s95
    %p97 = scmp.eq.s32.totalorder %s33, 0
    %p98 = por %p96, %p97
    %s99 = ssub.s32 %s35, %s42
    %p100 = scmp.eq.s32.totalorder %s99, 0
    %s102 = sadd.s32 %s101, 1
    %s103 = scalar_select %p100, %s101, %s102
    %p106 = pneg %p100
    %p107 = scmp.eq.s32.totalorder %s27, 3
    %p108 = por %p106, %p107
    %p109 = scmp.ne.s32.totalorder %s101, %s104
    %p110 = scmp.eq.s32.totalorder %s27, 0
    %p111 = por %p109, %p110
    %p112 = scmp.ne.s32.totalorder %s101, %s104
    %p113 = scmp.eq.s32.totalorder %s32, 3
    %p114 = por %p112, %p113
    %p115 = scmp.ne.s32.totalorder %s104, %s105
    %p116 = scmp.eq.s32.totalorder %s32, 0
    %p117 = por %p115, %p116
    %p118 = scmp.ne.s32.totalorder %s104, %s105
    %p119 = scmp.eq.s32.totalorder %s33, 3
    %p120 = por %p118, %p119
    %p122 = scmp.ne.s32.totalorder %s105, %s121
    %p123 = scmp.eq.s32.totalorder %s33, 0
    %p124 = por %p122, %p123
    %s125 = ssub.s32 %s35, %s42
    %p126 = scmp.eq.s32.totalorder %s125, 0
    %s128 = sadd.s32 %s127, 1
    %s129 = scalar_select %p126, %s127, %s128
    %p132 = pneg %p126
    %p133 = scmp.eq.s32.totalorder %s27, 3
    %p134 = por %p132, %p133
    %p135 = scmp.ne.s32.totalorder %s127, %s130
    %p136 = scmp.eq.s32.totalorder %s27, 0
    %p137 = por %p135, %p136
    %p138 = scmp.ne.s32.totalorder %s127, %s130
    %p139 = scmp.eq.s32.totalorder %s32, 3
    %p140 = por %p138, %p139
    %p141 = scmp.ne.s32.totalorder %s130, %s131
    %p142 = scmp.eq.s32.totalorder %s32, 0
    %p143 = por %p141, %p142
    %p144 = scmp.ne.s32.totalorder %s130, %s131
    %p145 = scmp.eq.s32.totalorder %s33, 3
    %p146 = por %p144, %p145
    %p148 = scmp.ne.s32.totalorder %s131, %s147
    %p149 = scmp.eq.s32.totalorder %s33, 0
    %p150 = por %p148, %p149
    %s151 = ssub.s32 %s35, %s42
    %p152 = scmp.eq.s32.totalorder %s151, 0
    %s154 = sadd.s32 %s153, 1
    %s155 = scalar_select %p152, %s153, %s154
    %p158 = pneg %p152
    %p159 = scmp.eq.s32.totalorder %s27, 3
    %p160 = por %p158, %p159
    %p161 = scmp.ne.s32.totalorder %s153, %s156
    %p162 = scmp.eq.s32.totalorder %s27, 0
    %p163 = por %p161, %p162
    %p164 = scmp.ne.s32.totalorder %s153, %s156
    %p165 = scmp.eq.s32.totalorder %s32, 3
    %p166 = por %p164, %p165
    %p167 = scmp.ne.s32.totalorder %s156, %s157
    %p168 = scmp.eq.s32.totalorder %s32, 0
    %p169 = por %p167, %p168
    %p170 = scmp.ne.s32.totalorder %s156, %s157
    %p171 = scmp.eq.s32.totalorder %s33, 3
    %p172 = por %p170, %p171
    %p174 = scmp.ne.s32.totalorder %s157, %s173
    %p175 = scmp.eq.s32.totalorder %s33, 0
    %p176 = por %p174, %p175
    %s177 = ssub.s32 %s35, %s42
    %p178 = scmp.eq.s32.totalorder %s177, 0
    %s180 = sadd.s32 %s179, 1
    %s181 = scalar_select %p178, %s179, %s180
    %p184 = pneg %p178
    %p185 = scmp.eq.s32.totalorder %s27, 3
    %p186 = por %p184, %p185
    %p187 = scmp.ne.s32.totalorder %s179, %s182
    %p188 = scmp.eq.s32.totalorder %s27, 0
    %p189 = por %p187, %p188
    %p190 = scmp.ne.s32.totalorder %s179, %s182
    %p191 = scmp.eq.s32.totalorder %s32, 3
    %p192 = por %p190, %p191
    %p193 = scmp.ne.s32.totalorder %s182, %s183
    %p194 = scmp.eq.s32.totalorder %s32, 0
    %p195 = por %p193, %p194
    %p196 = scmp.ne.s32.totalorder %s182, %s183
    %p197 = scmp.eq.s32.totalorder %s33, 3
    %p198 = por %p196, %p197
    %p200 = scmp.ne.s32.totalorder %s183, %s199
    %p201 = scmp.eq.s32.totalorder %s33, 0
    %p202 = por %p200, %p201
    %s203 = ssub.s32 %s35, %s42
    %p204 = scmp.eq.s32.totalorder %s203, 0
    %s206 = sadd.s32 %s205, 1
    %s207 = scalar_select %p204, %s205, %s206
    %p210 = pneg %p204
    %p211 = scmp.eq.s32.totalorder %s27, 3
    %p212 = por %p210, %p211
    %p213 = scmp.ne.s32.totalorder %s205, %s208
    %p214 = scmp.eq.s32.totalorder %s27, 0
    %p215 = por %p213, %p214
    %p216 = scmp.ne.s32.totalorder %s205, %s208
    %p217 = scmp.eq.s32.totalorder %s32, 3
    %p218 = por %p216, %p217
    %p219 = scmp.ne.s32.totalorder %s208, %s209
    %p220 = scmp.eq.s32.totalorder %s32, 0
    %p221 = por %p219, %p220
    %p222 = scmp.ne.s32.totalorder %s208, %s209
    %p223 = scmp.eq.s32.totalorder %s33, 3
    %p224 = por %p222, %p223
    %p226 = scmp.ne.s32.totalorder %s209, %s225
    %p227 = scmp.eq.s32.totalorder %s33, 0
    %p228 = por %p226, %p227
    %s229 = ssub.s32 %s35, %s42
    %p230 = scmp.eq.s32.totalorder %s229, 0
    %s232 = sadd.s32 %s231, 1
    %s233 = scalar_select %p230, %s231, %s232
    %p236 = pneg %p230
    %p237 = scmp.eq.s32.totalorder %s27, 3
    %p238 = por %p236, %p237
    %p239 = scmp.ne.s32.totalorder %s231, %s234
    %p240 = scmp.eq.s32.totalorder %s27, 0
    %p241 = por %p239, %p240
    %p242 = scmp.ne.s32.totalorder %s231, %s234
    %p243 = scmp.eq.s32.totalorder %s32, 3
    %p244 = por %p242, %p243
    %p245 = scmp.ne.s32.totalorder %s234, %s235
    %p246 = scmp.eq.s32.totalorder %s32, 0
    %p247 = por %p245, %p246
    %p248 = scmp.ne.s32.totalorder %s234, %s235
    %p249 = scmp.eq.s32.totalorder %s33, 3
    %p250 = por %p248, %p249
    %p252 = scmp.ne.s32.totalorder %s235, %s251
    %p253 = scmp.eq.s32.totalorder %s33, 0
    %p254 = por %p252, %p253
    %s255 = ssub.s32 %s35, %s42
    %p256 = scmp.eq.s32.totalorder %s255, 0
    %s258 = sadd.s32 %s257, 1
    %s259 = scalar_select %p256, %s257, %s258
    %p262 = pneg %p256
    %p263 = scmp.eq.s32.totalorder %s27, 3
    %p264 = por %p262, %p263
    %p265 = scmp.ne.s32.totalorder %s257, %s260
    %p266 = scmp.eq.s32.totalorder %s27, 0
    %p267 = por %p265, %p266
    %p268 = scmp.ne.s32.totalorder %s257, %s260
    %p269 = scmp.eq.s32.totalorder %s32, 3
    %p270 = por %p268, %p269
    %p271 = scmp.ne.s32.totalorder %s260, %s261
    %p272 = scmp.eq.s32.totalorder %s32, 0
    %p273 = por %p271, %p272
    %p274 = scmp.ne.s32.totalorder %s260, %s261
    %p275 = scmp.eq.s32.totalorder %s33, 3
    %p276 = por %p274, %p275
    %p278 = scmp.ne.s32.totalorder %s261, %s277
    %p279 = scmp.eq.s32.totalorder %s33, 0
    %p280 = por %p278, %p279
    %s281 = ssub.s32 %s35, %s42
    %p282 = scmp.eq.s32.totalorder %s281, 0
    %s284 = sadd.s32 %s283, 1
    %s285 = scalar_select %p282, %s283, %s284
    %p288 = pneg %p282
    %p289 = scmp.eq.s32.totalorder %s27, 3
    %p290 = por %p288, %p289
    %p291 = scmp.ne.s32.totalorder %s283, %s286
    %p292 = scmp.eq.s32.totalorder %s27, 0
    %p293 = por %p291, %p292
    %p294 = scmp.ne.s32.totalorder %s283, %s286
    %p295 = scmp.eq.s32.totalorder %s32, 3
    %p296 = por %p294, %p295
    %p297 = scmp.ne.s32.totalorder %s286, %s287
    %p298 = scmp.eq.s32.totalorder %s32, 0
    %p299 = por %p297, %p298
    %p300 = scmp.ne.s32.totalorder %s286, %s287
    %p301 = scmp.eq.s32.totalorder %s33, 3
    %p302 = por %p300, %p301
    %p304 = scmp.ne.s32.totalorder %s287, %s303
    %p305 = scmp.eq.s32.totalorder %s33, 0
    %p306 = por %p304, %p305
    %s307 = ssub.s32 %s35, %s42
    %p308 = scmp.eq.s32.totalorder %s307, 0
    %s310 = sadd.s32 %s309, 1
    %s311 = scalar_select %p308, %s309, %s310
    %p314 = pneg %p308
    %p315 = scmp.eq.s32.totalorder %s27, 3
    %p316 = por %p314, %p315
    %p317 = scmp.ne.s32.totalorder %s309, %s312
    %p318 = scmp.eq.s32.totalorder %s27, 0
    %p319 = por %p317, %p318
    %p320 = scmp.ne.s32.totalorder %s309, %s312
    %p321 = scmp.eq.s32.totalorder %s32, 3
    %p322 = por %p320, %p321
    %p323 = scmp.ne.s32.totalorder %s312, %s313
    %p324 = scmp.eq.s32.totalorder %s32, 0
    %p325 = por %p323, %p324
    %p326 = scmp.ne.s32.totalorder %s312, %s313
    %p327 = scmp.eq.s32.totalorder %s33, 3
    %p328 = por %p326, %p327
    %p330 = scmp.ne.s32.totalorder %s313, %s329
    %p331 = scmp.eq.s32.totalorder %s33, 0
    %p332 = por %p330, %p331
    %s333 = ssub.s32 %s35, %s42
    %p334 = scmp.eq.s32.totalorder %s333, 0
    %s336 = sadd.s32 %s335, 1
    %s337 = scalar_select %p334, %s335, %s336
    %p340 = pneg %p334
    %p341 = scmp.eq.s32.totalorder %s27, 3
    %p342 = por %p340, %p341
    %p343 = scmp.ne.s32.totalorder %s335, %s338
    %p344 = scmp.eq.s32.totalorder %s27, 0
    %p345 = por %p343, %p344
    %p346 = scmp.ne.s32.totalorder %s335, %s338
    %p347 = scmp.eq.s32.totalorder %s32, 3
    %p348 = por %p346, %p347
    %p349 = scmp.ne.s32.totalorder %s338, %s339
    %p350 = scmp.eq.s32.totalorder %s32, 0
    %p351 = por %p349, %p350
    %p352 = scmp.ne.s32.totalorder %s338, %s339
    %p353 = scmp.eq.s32.totalorder %s33, 3
    %p354 = por %p352, %p353
    %p356 = scmp.ne.s32.totalorder %s339, %s355
    %p357 = scmp.eq.s32.totalorder %s33, 0
    %p358 = por %p356, %p357
    %s359 = ssub.s32 %s35, %s42
    %p360 = scmp.eq.s32.totalorder %s359, 0
    %s362 = sadd.s32 %s361, 1
    %s363 = scalar_select %p360, %s361, %s362
    %p366 = pneg %p360
    %p367 = scmp.eq.s32.totalorder %s27, 3
    %p368 = por %p366, %p367
    %p369 = scmp.ne.s32.totalorder %s361, %s364
    %p370 = scmp.eq.s32.totalorder %s27, 0
    %p371 = por %p369, %p370
    %p372 = scmp.ne.s32.totalorder %s361, %s364
    %p373 = scmp.eq.s32.totalorder %s32, 3
    %p374 = por %p372, %p373
    %p375 = scmp.ne.s32.totalorder %s364, %s365
    %p376 = scmp.eq.s32.totalorder %s32, 0
    %p377 = por %p375, %p376
    %p378 = scmp.ne.s32.totalorder %s364, %s365
    %p379 = scmp.eq.s32.totalorder %s33, 3
    %p380 = por %p378, %p379
    %p382 = scmp.ne.s32.totalorder %s365, %s381
    %p383 = scmp.eq.s32.totalorder %s33, 0
    %p384 = por %p382, %p383
    %s386 = sadd.s32 %s385, 1
    %p389 = scmp.eq.s32.totalorder %s27, 3
    %p390 = scmp.ne.s32.totalorder %s385, %s387
    %p391 = scmp.eq.s32.totalorder %s27, 0
    %p392 = por %p390, %p391
    %p393 = scmp.ne.s32.totalorder %s385, %s387
    %p394 = scmp.eq.s32.totalorder %s32, 3
    %p395 = por %p393, %p394
    %p396 = scmp.ne.s32.totalorder %s387, %s388
    %p397 = scmp.eq.s32.totalorder %s32, 0
    %p398 = por %p396, %p397
    %p399 = scmp.ne.s32.totalorder %s387, %s388
    %p400 = scmp.eq.s32.totalorder %s33, 3
    %p401 = por %p399, %p400
    %p403 = scmp.ne.s32.totalorder %s388, %s402
    %p404 = scmp.eq.s32.totalorder %s33, 0
    %p405 = por %p403, %p404
    %s407 = sadd.s32 %s406, 1
    %p410 = scmp.eq.s32.totalorder %s27, 3
    %p411 = scmp.ne.s32.totalorder %s406, %s408
    %p412 = scmp.eq.s32.totalorder %s27, 0
    %p413 = por %p411, %p412
    %p414 = scmp.ne.s32.totalorder %s406, %s408
    %p415 = scmp.eq.s32.totalorder %s32, 3
    %p416 = por %p414, %p415
    %p417 = scmp.ne.s32.totalorder %s408, %s409
    %p418 = scmp.eq.s32.totalorder %s32, 0
    %p419 = por %p417, %p418
    %p420 = scmp.ne.s32.totalorder %s408, %s409
    %p421 = scmp.eq.s32.totalorder %s33, 3
    %p422 = por %p420, %p421
    %p424 = scmp.ne.s32.totalorder %s409, %s423
    %p425 = scmp.eq.s32.totalorder %s33, 0
    %p426 = por %p424, %p425
    %s428 = sadd.s32 %s427, 1
    %p431 = scmp.eq.s32.totalorder %s27, 3
    %p432 = scmp.ne.s32.totalorder %s427, %s429
    %p433 = scmp.eq.s32.totalorder %s27, 0
    %p434 = por %p432, %p433
    %p435 = scmp.ne.s32.totalorder %s427, %s429
    %p436 = scmp.eq.s32.totalorder %s32, 3
    %p437 = por %p435, %p436
    %p438 = scmp.ne.s32.totalorder %s429, %s430
    %p439 = scmp.eq.s32.totalorder %s32, 0
    %p440 = por %p438, %p439
    %p441 = scmp.ne.s32.totalorder %s429, %s430
    %p442 = scmp.eq.s32.totalorder %s33, 3
    %p443 = por %p441, %p442
    %p445 = scmp.ne.s32.totalorder %s430, %s444
    %p446 = scmp.eq.s32.totalorder %s33, 0
    %p447 = por %p445, %p446
    %s449 = sadd.s32 %s448, 1
    %p452 = scmp.eq.s32.totalorder %s27, 3
    %p453 = scmp.ne.s32.totalorder %s448, %s450
    %p454 = scmp.eq.s32.totalorder %s27, 0
    %p455 = por %p453, %p454
    %p456 = scmp.ne.s32.totalorder %s448, %s450
    %p457 = scmp.eq.s32.totalorder %s32, 3
    %p458 = por %p456, %p457
    %p459 = scmp.ne.s32.totalorder %s450, %s451
    %p460 = scmp.eq.s32.totalorder %s32, 0
    %p461 = por %p459, %p460
    %p462 = scmp.ne.s32.totalorder %s450, %s451
    %p463 = scmp.eq.s32.totalorder %s33, 3
    %p464 = por %p462, %p463
    %p466 = scmp.ne.s32.totalorder %s451, %s465
    %p467 = scmp.eq.s32.totalorder %s33, 0
    %p468 = por %p466, %p467
    %s470 = sadd.s32 %s469, 1
    %p473 = scmp.eq.s32.totalorder %s27, 3
    %p474 = scmp.ne.s32.totalorder %s469, %s471
    %p475 = scmp.eq.s32.totalorder %s27, 0
    %p476 = por %p474, %p475
    %p477 = scmp.ne.s32.totalorder %s469, %s471
    %p478 = scmp.eq.s32.totalorder %s32, 3
    %p479 = por %p477, %p478
    %p480 = scmp.ne.s32.totalorder %s471, %s472
    %p481 = scmp.eq.s32.totalorder %s32, 0
    %p482 = por %p480, %p481
    %p483 = scmp.ne.s32.totalorder %s471, %s472
    %p484 = scmp.eq.s32.totalorder %s33, 3
    %p485 = por %p483, %p484
    %p487 = scmp.ne.s32.totalorder %s472, %s486
    %p488 = scmp.eq.s32.totalorder %s33, 0
    %p489 = por %p487, %p488
    %s491 = sadd.s32 %s490, 1
    %p494 = scmp.eq.s32.totalorder %s27, 3
    %p495 = scmp.ne.s32.totalorder %s490, %s492
    %p496 = scmp.eq.s32.totalorder %s27, 0
    %p497 = por %p495, %p496
    %p498 = scmp.ne.s32.totalorder %s490, %s492
    %p499 = scmp.eq.s32.totalorder %s32, 3
    %p500 = por %p498, %p499
    %p501 = scmp.ne.s32.totalorder %s492, %s493
    %p502 = scmp.eq.s32.totalorder %s32, 0
    %p503 = por %p501, %p502
    %p504 = scmp.ne.s32.totalorder %s492, %s493
    %p505 = scmp.eq.s32.totalorder %s33, 3
    %p506 = por %p504, %p505
    %p508 = scmp.ne.s32.totalorder %s493, %s507
    %p509 = scmp.eq.s32.totalorder %s33, 0
    %p510 = por %p508, %p509
    %s511 = ssub.s32 %s34, %s46
    %p512 = scmp.eq.s32.totalorder %s511, 0
    %s514 = sadd.s32 %s513, 1
    %s515 = scalar_select %p512, %s513, %s514
    %p518 = pneg %p512
    %p519 = scmp.eq.s32.totalorder %s27, 3
    %p520 = por %p518, %p519
    %p521 = scmp.ne.s32.totalorder %s513, %s516
    %p522 = scmp.eq.s32.totalorder %s27, 0
    %p523 = por %p521, %p522
    %p524 = scmp.ne.s32.totalorder %s513, %s516
    %p525 = scmp.eq.s32.totalorder %s32, 3
    %p526 = por %p524, %p525
    %p527 = scmp.ne.s32.totalorder %s516, %s517
    %p528 = scmp.eq.s32.totalorder %s32, 0
    %p529 = por %p527, %p528
    %p530 = scmp.ne.s32.totalorder %s516, %s517
    %p531 = scmp.eq.s32.totalorder %s33, 3
    %p532 = por %p530, %p531
    %p534 = scmp.ne.s32.totalorder %s517, %s533
    %p535 = scmp.eq.s32.totalorder %s33, 0
    %p536 = por %p534, %p535
    %p537 = scmp.le.s32.totalorder 1, %s27
    %p538 = scmp.lt.s32.totalorder %s27, 5
    %p539 = pnand %p537, %p538
    %p540 = pneg %p539
    // Predicated region
    $region9: #{stp_forward.1} parent=5 // pred_check
      _
    $region10: #{stp_forward.1} parent=5 // pred_check_branch
      %542 = sbr.rel (%p539) target = $region12
    $region11: #{stp_forward.1} parent=5 // pred_region
      %s543 = ssub.s32 %s27, 1
      // Predicated region
      $region13: #{stp_forward.1} parent=11 // pred_check
        %p544 = pneg %p398
      $region14: #{stp_forward.1} parent=11 // pred_check_branch
        %546 = sbr.rel (%p544) target = $region16
      $region15: #{stp_forward.1} parent=11 // pred_region
        _
      $region16: #{stp_forward.1} parent=11 // pred_fallthru
        _
      // Predicated region
      $region17: #{stp_forward.1} parent=11 // pred_check
        %p547 = pneg %p419
      $region18: #{stp_forward.1} parent=11 // pred_check_branch
        %549 = sbr.rel (%p547) target = $region20
      $region19: #{stp_forward.1} parent=11 // pred_region
        _
      $region20: #{stp_forward.1} parent=11 // pred_fallthru
        _
      // Predicated region
      $region21: #{stp_forward.1} parent=11 // pred_check
        %p550 = pneg %p440
      $region22: #{stp_forward.1} parent=11 // pred_check_branch
        %552 = sbr.rel (%p550) target = $region24
      $region23: #{stp_forward.1} parent=11 // pred_region
        _
      $region24: #{stp_forward.1} parent=11 // pred_fallthru
        _
      // Predicated region
      $region25: #{stp_forward.1} parent=11 // pred_check
        %p553 = pneg %p461
      $region26: #{stp_forward.1} parent=11 // pred_check_branch
        %555 = sbr.rel (%p553) target = $region28
      $region27: #{stp_forward.1} parent=11 // pred_region
        _
      $region28: #{stp_forward.1} parent=11 // pred_fallthru
        _
      // Predicated region
      $region29: #{stp_forward.1} parent=11 // pred_check
        %p556 = pneg %p482
      $region30: #{stp_forward.1} parent=11 // pred_check_branch
        %558 = sbr.rel (%p556) target = $region32
      $region31: #{stp_forward.1} parent=11 // pred_region
        _
      $region32: #{stp_forward.1} parent=11 // pred_fallthru
        _
      // Predicated region
      $region33: #{stp_forward.1} parent=11 // pred_check
        %p559 = pneg %p503
      $region34: #{stp_forward.1} parent=11 // pred_check_branch
        %561 = sbr.rel (%p559) target = $region36
      $region35: #{stp_forward.1} parent=11 // pred_region
        _
      $region36: #{stp_forward.1} parent=11 // pred_fallthru
        _
    $region12: #{stp_forward.1} parent=5 // pred_fallthru
      _
    %p562 = scmp.lt.s32.totalorder %s27, 4
    // Predicated region
    $region37: #{stp_forward.1} parent=5 // pred_check
      %p563 = pneg %p562
    $region38: #{stp_forward.1} parent=5 // pred_check_branch
      %565 = sbr.rel (%p563) target = $region40
    $region39: #{stp_forward.1} parent=5 // pred_region
      // Predicated region
      $region41: #{stp_forward.1} parent=39 // pred_check
        %p566 = pneg %p59
      $region42: #{stp_forward.1} parent=39 // pred_check_branch
        %568 = sbr.rel (%p566) target = $region44
      $region43: #{stp_forward.1} parent=39 // pred_region
        %p569 = scmp.lt.s32.totalorder %s34, 1
        %s570 = scalar_select %p569, %s34, 1
        %s571 = smul.addr %s570, 8
        %s572 = scalar_lea.vmem %s0, %s571
      $region44: #{stp_forward.1} parent=39 // pred_fallthru
        _
      // Predicated region
      $region45: #{stp_forward.1} parent=39 // pred_check
        %p573 = pneg %p85
      $region46: #{stp_forward.1} parent=39 // pred_check_branch
        %575 = sbr.rel (%p573) target = $region48
      $region47: #{stp_forward.1} parent=39 // pred_region
        %p576 = scmp.lt.s32.totalorder %s35, 1
        %s577 = scalar_select %p576, %s35, 1
        %s578 = smul.addr %s577, 4
        %s579 = smul.addr %s578, 4
        %s580 = scalar_lea.vmem %s1, %s579
      $region48: #{stp_forward.1} parent=39 // pred_fallthru
        _
      // Predicated region
      $region49: #{stp_forward.1} parent=39 // pred_check
        %p581 = pneg %p111
      $region50: #{stp_forward.1} parent=39 // pred_check_branch
        %583 = sbr.rel (%p581) target = $region52
      $region51: #{stp_forward.1} parent=39 // pred_region
        %p584 = scmp.lt.s32.totalorder %s35, 1
        %s585 = scalar_select %p584, %s35, 1
        %s586 = scalar_lea.vmem %s2, %s585
      $region52: #{stp_forward.1} parent=39 // pred_fallthru
        _
      // Predicated region
      $region53: #{stp_forward.1} parent=39 // pred_check
        %p587 = pneg %p137
      $region54: #{stp_forward.1} parent=39 // pred_check_branch
        %589 = sbr.rel (%p587) target = $region56
      $region55: #{stp_forward.1} parent=39 // pred_region
        %p590 = scmp.lt.s32.totalorder %s35, 1
        %s591 = scalar_select %p590, %s35, 1
        %s592 = smul.addr %s591, 4
        %s593 = smul.addr %s592, 4
        %s594 = scalar_lea.vmem %s3, %s593
      $region56: #{stp_forward.1} parent=39 // pred_fallthru
        _
      // Predicated region
      $region57: #{stp_forward.1} parent=39 // pred_check
        %p595 = pneg %p163
      $region58: #{stp_forward.1} parent=39 // pred_check_branch
        %597 = sbr.rel (%p595) target = $region60
      $region59: #{stp_forward.1} parent=39 // pred_region
        %p598 = scmp.lt.s32.totalorder %s35, 1
        %s599 = scalar_select %p598, %s35, 1
        %s600 = scalar_lea.vmem %s4, %s599
      $region60: #{stp_forward.1} parent=39 // pred_fallthru
        _
      // Predicated region
      $region61: #{stp_forward.1} parent=39 // pred_check
        %p601 = pneg %p189
      $region62: #{stp_forward.1} parent=39 // pred_check_branch
        %603 = sbr.rel (%p601) target = $region64
      $region63: #{stp_forward.1} parent=39 // pred_region
        %p604 = scmp.lt.s32.totalorder %s35, 1
        %s605 = scalar_select %p604, %s35, 1
        %s606 = scalar_lea.vmem %s5, %s605
      $region64: #{stp_forward.1} parent=39 // pred_fallthru
        _
      // Predicated region
      $region65: #{stp_forward.1} parent=39 // pred_check
        %p607 = pneg %p215
      $region66: #{stp_forward.1} parent=39 // pred_check_branch
        %609 = sbr.rel (%p607) target = $region68
      $region67: #{stp_forward.1} parent=39 // pred_region
        %p610 = scmp.lt.s32.totalorder %s35, 1
        %s611 = scalar_select %p610, %s35, 1
        %s612 = scalar_lea.vmem %s6, %s611
      $region68: #{stp_forward.1} parent=39 // pred_fallthru
        _
      // Predicated region
      $region69: #{stp_forward.1} parent=39 // pred_check
        %p613 = pneg %p241
      $region70: #{stp_forward.1} parent=39 // pred_check_branch
        %615 = sbr.rel (%p613) target = $region72
      $region71: #{stp_forward.1} parent=39 // pred_region
        %p616 = scmp.lt.s32.totalorder %s35, 1
        %s617 = scalar_select %p616, %s35, 1
        %s618 = scalar_lea.vmem %s7, %s617
      $region72: #{stp_forward.1} parent=39 // pred_fallthru
        _
      // Predicated region
      $region73: #{stp_forward.1} parent=39 // pred_check
        %p619 = pneg %p267
      $region74: #{stp_forward.1} parent=39 // pred_check_branch
        %621 = sbr.rel (%p619) target = $region76
      $region75: #{stp_forward.1} parent=39 // pred_region
        %p622 = scmp.lt.s32.totalorder %s35, 1
        %s623 = scalar_select %p622, %s35, 1
        %s624 = scalar_lea.vmem %s8, %s623
      $region76: #{stp_forward.1} parent=39 // pred_fallthru
        _
      // Predicated region
      $region77: #{stp_forward.1} parent=39 // pred_check
        %p625 = pneg %p293
      $region78: #{stp_forward.1} parent=39 // pred_check_branch
        %627 = sbr.rel (%p625) target = $region80
      $region79: #{stp_forward.1} parent=39 // pred_region
        %p628 = scmp.lt.s32.totalorder %s35, 1
        %s629 = scalar_select %p628, %s35, 1
        %s630 = smul.addr %s629, 4
        %s631 = smul.addr %s630, 4
        %s632 = scalar_lea.vmem %s9, %s631
      $region80: #{stp_forward.1} parent=39 // pred_fallthru
        _
      // Predicated region
      $region81: #{stp_forward.1} parent=39 // pred_check
        %p633 = pneg %p319
      $region82: #{stp_forward.1} parent=39 // pred_check_branch
        %635 = sbr.rel (%p633) target = $region84
      $region83: #{stp_forward.1} parent=39 // pred_region
        %p636 = scmp.lt.s32.totalorder %s35, 1
        %s637 = scalar_select %p636, %s35, 1
        %s638 = scalar_lea.vmem %s10, %s637
      $region84: #{stp_forward.1} parent=39 // pred_fallthru
        _
      // Predicated region
      $region85: #{stp_forward.1} parent=39 // pred_check
        %p639 = pneg %p345
      $region86: #{stp_forward.1} parent=39 // pred_check_branch
        %641 = sbr.rel (%p639) target = $region88
      $region87: #{stp_forward.1} parent=39 // pred_region
        %p642 = scmp.lt.s32.totalorder %s35, 1
        %s643 = scalar_select %p642, %s35, 1
        %s644 = smul.addr %s643, 8
        %s645 = smul.addr %s644, 4
        %s646 = scalar_lea.vmem %s11, %s645
      $region88: #{stp_forward.1} parent=39 // pred_fallthru
        _
      // Predicated region
      $region89: #{stp_forward.1} parent=39 // pred_check
        %p647 = pneg %p371
      $region90: #{stp_forward.1} parent=39 // pred_check_branch
        %649 = sbr.rel (%p647) target = $region92
      $region91: #{stp_forward.1} parent=39 // pred_region
        %p650 = scmp.lt.s32.totalorder %s35, 1
        %s651 = scalar_select %p650, %s35, 1
        %s652 = scalar_lea.vmem %s12, %s651
      $region92: #{stp_forward.1} parent=39 // pred_fallthru
        _
    $region40: #{stp_forward.1} parent=5 // pred_fallthru
      _
    %p653 = scmp.le.s32.totalorder 1, %s27
    %p654 = scmp.lt.s32.totalorder %s27, 5
    %p655 = pnand %p653, %p654
    %p656 = pneg %p655
    // Predicated region
    $region93: #{stp_forward.1} parent=5 // pred_check
      _
    $region94: #{stp_forward.1} parent=5 // pred_check_branch
      %658 = sbr.rel (%p655) target = $region96
    $region95: #{stp_forward.1} parent=5 // pred_region
      %s659 = ssub.s32 %s27, 1
      %p660 = scmp.lt.s32.totalorder %s36, 1
      %s661 = scalar_select %p660, %s36, 1
      %s662 = smul.addr %s661, 8
      %s663 = scalar_lea.vmem %s0, %s662
      %p664 = pneg %p65
      %p665 = pneg %p62
      %p666 = scmp.lt.s32.totalorder %s37, 1
      %s667 = scalar_select %p666, %s37, 1
      %s668 = smul.addr %s667, 4
      %s669 = smul.addr %s668, 4
      %s670 = scalar_lea.vmem %s1, %s669
      %p671 = pneg %p91
      %p672 = pneg %p88
      %p673 = scmp.lt.s32.totalorder %s37, 1
      %s674 = scalar_select %p673, %s37, 1
      %s675 = scalar_lea.vmem %s2, %s674
      %p676 = pneg %p117
      %p677 = pneg %p114
      %p678 = scmp.lt.s32.totalorder %s37, 1
      %s679 = scalar_select %p678, %s37, 1
      %s680 = smul.addr %s679, 4
      %s681 = smul.addr %s680, 4
      %s682 = scalar_lea.vmem %s3, %s681
      %p683 = pneg %p143
      %p684 = pneg %p140
      %p685 = scmp.lt.s32.totalorder %s37, 1
      %s686 = scalar_select %p685, %s37, 1
      %s687 = scalar_lea.vmem %s4, %s686
      %p688 = pneg %p169
      %p689 = pneg %p166
      %p690 = scmp.lt.s32.totalorder %s37, 1
      %s691 = scalar_select %p690, %s37, 1
      %s692 = scalar_lea.vmem %s5, %s691
      %p693 = pneg %p195
      %p694 = pneg %p192
      %p695 = scmp.lt.s32.totalorder %s37, 1
      %s696 = scalar_select %p695, %s37, 1
      %s697 = scalar_lea.vmem %s6, %s696
      %p698 = pneg %p221
      %p699 = pneg %p218
      %p700 = scmp.lt.s32.totalorder %s37, 1
      %s701 = scalar_select %p700, %s37, 1
      %s702 = scalar_lea.vmem %s7, %s701
      %p703 = pneg %p247
      %p704 = pneg %p244
      %p705 = scmp.lt.s32.totalorder %s37, 1
      %s706 = scalar_select %p705, %s37, 1
      %s707 = scalar_lea.vmem %s8, %s706
      %p708 = pneg %p273
      %p709 = pneg %p270
      %p710 = scmp.lt.s32.totalorder %s37, 1
      %s711 = scalar_select %p710, %s37, 1
      %s712 = smul.addr %s711, 4
      %s713 = smul.addr %s712, 4
      %s714 = scalar_lea.vmem %s9, %s713
      %p715 = pneg %p299
      %p716 = pneg %p296
      %p717 = scmp.lt.s32.totalorder %s37, 1
      %s718 = scalar_select %p717, %s37, 1
      %s719 = scalar_lea.vmem %s10, %s718
      %p720 = pneg %p325
      %p721 = pneg %p322
      %p722 = scmp.lt.s32.totalorder %s37, 1
      %s723 = scalar_select %p722, %s37, 1
      %s724 = smul.addr %s723, 8
      %s725 = smul.addr %s724, 4
      %s726 = scalar_lea.vmem %s11, %s725
      %p727 = pneg %p351
      %p728 = pneg %p348
      %p729 = scmp.lt.s32.totalorder %s37, 1
      %s730 = scalar_select %p729, %s37, 1
      %s731 = scalar_lea.vmem %s12, %s730
      %p732 = pneg %p377
      %p733 = pneg %p374
      %p734 = pneg %p398
      %p735 = pneg %p395
      %p736 = pneg %p419
      %p737 = pneg %p416
      %p738 = pneg %p440
      %p739 = pneg %p437
      %p740 = pneg %p461
      %p741 = pneg %p458
      %p742 = pneg %p482
      %p743 = pneg %p479
      %p744 = pneg %p503
      %p745 = pneg %p500
      %p746 = pneg %p529
      %p747 = pneg %p526
      %p748 = scmp.lt.s32.totalorder %s36, 1
      %s749 = scalar_select %p748, %s36, 1
      %s750 = scalar_lea.vmem %s19, %s749
      %p751 = scmp.lt.s32.totalorder %s36, 1
      %s752 = scalar_select %p751, %s36, 1
      %s753 = smul.addr %s752, 8
      %s754 = scalar_lea.vmem %s0, %s753
      %p755 = scmp.lt.s32.totalorder %s37, 1
      %s756 = scalar_select %p755, %s37, 1
      %s757 = smul.addr %s756, 4
      %s758 = smul.addr %s757, 4
      %s759 = scalar_lea.vmem %s1, %s758
      %p760 = scmp.lt.s32.totalorder %s37, 1
      %s761 = scalar_select %p760, %s37, 1
      %s762 = scalar_lea.vmem %s2, %s761
      %p763 = scmp.lt.s32.totalorder %s37, 1
      %s764 = scalar_select %p763, %s37, 1
      %s765 = smul.addr %s764, 4
      %s766 = smul.addr %s765, 4
      %s767 = scalar_lea.vmem %s3, %s766
      %p768 = scmp.lt.s32.totalorder %s37, 1
      %s769 = scalar_select %p768, %s37, 1
      %s770 = scalar_lea.vmem %s4, %s769
      %p771 = scmp.lt.s32.totalorder %s37, 1
      %s772 = scalar_select %p771, %s37, 1
      %s773 = scalar_lea.vmem %s5, %s772
      %p774 = scmp.lt.s32.totalorder %s37, 1
      %s775 = scalar_select %p774, %s37, 1
      %s776 = scalar_lea.vmem %s6, %s775
      %p777 = scmp.lt.s32.totalorder %s37, 1
      %s778 = scalar_select %p777, %s37, 1
      %s779 = scalar_lea.vmem %s7, %s778
      %p780 = scmp.lt.s32.totalorder %s37, 1
      %s781 = scalar_select %p780, %s37, 1
      %s782 = scalar_lea.vmem %s8, %s781
      %p783 = scmp.lt.s32.totalorder %s37, 1
      %s784 = scalar_select %p783, %s37, 1
      %s785 = smul.addr %s784, 4
      %s786 = smul.addr %s785, 4
      %s787 = scalar_lea.vmem %s9, %s786
      %p788 = scmp.lt.s32.totalorder %s37, 1
      %s789 = scalar_select %p788, %s37, 1
      %s790 = scalar_lea.vmem %s10, %s789
      %p791 = scmp.lt.s32.totalorder %s37, 1
      %s792 = scalar_select %p791, %s37, 1
      %s793 = smul.addr %s792, 8
      %s794 = smul.addr %s793, 4
      %s795 = scalar_lea.vmem %s11, %s794
      %p796 = scmp.lt.s32.totalorder %s37, 1
      %s797 = scalar_select %p796, %s37, 1
      %s798 = scalar_lea.vmem %s12, %s797
      %p799 = scmp.lt.s32.totalorder %s36, 1
      %s800 = scalar_select %p799, %s36, 1
      %s801 = scalar_lea.vmem %s19, %s800
      %p803 = scmp.eq.s32.totalorder %s37, 0
      // Predicated region
      $region97: #{stp_forward.1} parent=95 // pred_check
        %p804 = pneg %p803
      $region98: #{stp_forward.1} parent=95 // pred_check_branch
        %806 = sbr.rel (%p804) target = $region100
      $region99: #{stp_forward.1} parent=95 // pred_region
        %v807 = vld [vmem:[%s754] sm:$0xff]
        %vm808 = vcmask 261120
        %809 = vst.msk [vmem:[#allocation2] sm:$0xff] %vm808, %v807
      $region100: #{stp_forward.1} parent=95 // pred_fallthru
        _
      %v810 = vld [vmem:[#allocation2] sm:$0xff]
      %v811 = vpack.c.bf16 %v810, %v810
      %v812 = vld [vmem:[%s759] sm:$0xf]
      %v813 = vld [vmem:[%s759 + $0x4] sm:$0xf]
      %v814 = vld [vmem:[%s759 + $0x8] sm:$0xf]
      %v815 = vld [vmem:[%s759 + $0xc] sm:$0xf]
      %v816 = vld [vmem:[%s762] sm:$0x1]
      %v818 = vlaneseq
      %v819 = vshrl.u32 %v818, 7
      %v820 = vsub.s32 0, %v819
      %v821 = vrot.slane %v816, %v820
      %v827 = vunpack.c.l.b16 %v812
      %v828 = vunpack.c.l.b16 %v813
      %v829 = vunpack.c.l.b16 %v814
      %v830 = vunpack.c.l.b16 %v815
      %v831 = vpack.c.b16 %v828, %v827
      %v832 = vpack.c.b16 %v830, %v829
      %vm835 = vcmask 261120
      %v837 = vsel %vm835, %v811, 0
      %839 = vmatprep.subr.bf16.mxu0 0
      %840 = vmatpush1.bf16.msra.mxu0 %v831
      %841 = vmatprep.subr.bf16.mxu0 0
      %842 = vmatpush1.bf16.msra.mxu0 %v832
      %843 = vmatprep.subr.bf16.mxu0 0
      %844 = vmatpush1.bf16.msra.mxu0 0
      %845 = vmatprep.subr.bf16.mxu0 0
      %846 = vmatpush1.bf16.msra.mxu0 0
      %847 = vmatprep.subr.bf16.mxu0 0
      %848 = vmatpush1.bf16.msra.mxu0 0
      %849 = vmatprep.subr.bf16.mxu0 0
      %850 = vmatpush1.bf16.msra.mxu0 0
      %851 = vmatprep.subr.bf16.mxu0 0
      %852 = vmatpush1.bf16.msra.mxu0 0
      %853 = vmatprep.subr.bf16.mxu0 0
      %854 = vmatpush1.bf16.msra.mxu0 0
      %855 = vmatprep.subr.bf16.mxu0 0
      %856 = vmatpush1.bf16.msra.mxu0 0
      %857 = vmatprep.subr.bf16.mxu0 0
      %858 = vmatpush1.bf16.msra.mxu0 0
      %859 = vmatprep.subr.bf16.mxu0 0
      %860 = vmatpush1.bf16.msra.mxu0 0
      %861 = vmatprep.subr.bf16.mxu0 0
      %862 = vmatpush1.bf16.msra.mxu0 0
      %863 = vmatprep.subr.bf16.mxu0 0
      %864 = vmatpush1.bf16.msra.mxu0 0
      %865 = vmatprep.subr.bf16.mxu0 0
      %866 = vmatpush1.bf16.msra.mxu0 0
      %867 = vmatprep.subr.bf16.mxu0 0
      %868 = vmatpush1.bf16.msra.mxu0 0
      %869 = vmatprep.subr.bf16.mxu0 0
      %870 = vmatpush1.bf16.msra.mxu0 0
      %871 = vmatprep.mubr.bf16.mxu0 0
      %872 = vmatmul.mubr.bf16.gmra.mrb[0].mxu0 %v837
      %v873 = vpop.f32.mrb[0].mxu0
      %v874 = vadd.f32 %v821, %v873
      %v875 = vpop.f32.mrb[0].mxu0
      %v876 = vpop.f32.mrb[0].mxu0
      %v877 = vpop.f32.mrb[0].mxu0
      %878 = vdwg.mxu0
      %v879 = vpack.c.bf16 %v874, %v874
      %881 = vrot.lane.b32.xlu0 %v879, 96
      %v882 = vpop.permute.xlu0 %881
      %vm883 = vcmask 64512
      %v885 = vsel %vm883, %v879, 0
      %v888 = vsel %vm883, %v882, 0
      %890 = vmatprep.subr.bf16.mxu0 0
      %891 = vmatpush1.bf16.xpose.msra.mxu0 %v888
      %892 = vmatprep.subr.bf16.mxu0 0
      %893 = vmatpush1.bf16.xpose.msra.mxu0 0
      %894 = vmatprep.subr.bf16.mxu0 0
      %895 = vmatpush1.bf16.xpose.msra.mxu0 0
      %896 = vmatprep.subr.bf16.mxu0 0
      %897 = vmatpush1.bf16.xpose.msra.mxu0 0
      %898 = vmatprep.subr.bf16.mxu0 0
      %899 = vmatpush1.bf16.xpose.msra.mxu0 0
      %900 = vmatprep.subr.bf16.mxu0 0
      %901 = vmatpush1.bf16.xpose.msra.mxu0 0
      %902 = vmatprep.subr.bf16.mxu0 0
      %903 = vmatpush1.bf16.xpose.msra.mxu0 0
      %904 = vmatprep.subr.bf16.mxu0 0
      %905 = vmatpush1.bf16.xpose.msra.mxu0 0
      %906 = vmatprep.subr.bf16.mxu0 0
      %907 = vmatpush1.bf16.xpose.msra.mxu0 0
      %908 = vmatprep.subr.bf16.mxu0 0
      %909 = vmatpush1.bf16.xpose.msra.mxu0 0
      %910 = vmatprep.subr.bf16.mxu0 0
      %911 = vmatpush1.bf16.xpose.msra.mxu0 0
      %912 = vmatprep.subr.bf16.mxu0 0
      %913 = vmatpush1.bf16.xpose.msra.mxu0 0
      %914 = vmatprep.subr.bf16.mxu0 0
      %915 = vmatpush1.bf16.xpose.msra.mxu0 0
      %916 = vmatprep.subr.bf16.mxu0 0
      %917 = vmatpush1.bf16.xpose.msra.mxu0 0
      %918 = vmatprep.subr.bf16.mxu0 0
      %919 = vmatpush1.bf16.xpose.msra.mxu0 0
      %920 = vmatprep.subr.bf16.mxu0 0
      %921 = vmatpush1.bf16.xpose.msra.mxu0 0
      %922 = vmatprep.mubr.bf16.mxu0 0
      %923 = vmatmul.mubr.bf16.gmra.mrb[0].mxu0 %v885
      %v924 = vpop.f32.mrb[0].mxu0
      %v925 = vadd.f32 0.0, %v924
      %v926 = vpop.f32.mrb[0].mxu0
      %v927 = vpop.f32.mrb[0].mxu0
      %v928 = vpop.f32.mrb[0].mxu0
      %929 = vdwg.mxu0
      %v930 = vsel %vm883, %v925, -inf
      %931 = vmax.xlane.f32.xlu0 %v930
      %v932 = vpop.xlane.xlu0 %931
      %v933 = vsub.f32 %v925, %v932
      %v934 = vmul.f32 %v933, 1.442695
      %v935 = vpow.pop %v934
      %v936 = vsel %vm883, %v935, 0.0
      %937 = vadd.xlane.f32.xlu0 %v936
      %v938 = vpop.xlane.xlu0 %937
      %v939 = vrcp.pop %v938
      %v940 = vmul.f32 %v935, %v939
      %v941 = vpack.c.bf16 %v940, %v940
      %942 = vrot.lane.b32.xlu0 %v879, 64
      %v943 = vpop.permute.xlu0 %942
      %v945 = vsel %vm883, %v941, 0
      %vm947 = vcmask 1043456
      %v949 = vsel %vm947, %v943, 0
      %951 = vmatprep.subr.bf16.mxu0 0
      %952 = vmatpush1.bf16.msra.mxu0 %v949
      %953 = vmatprep.subr.bf16.mxu0 0
      %954 = vmatpush1.bf16.msra.mxu0 0
      %955 = vmatprep.subr.bf16.mxu0 0
      %956 = vmatpush1.bf16.msra.mxu0 0
      %957 = vmatprep.subr.bf16.mxu0 0
      %958 = vmatpush1.bf16.msra.mxu0 0
      %959 = vmatprep.subr.bf16.mxu0 0
      %960 = vmatpush1.bf16.msra.mxu0 0
      %961 = vmatprep.subr.bf16.mxu0 0
      %962 = vmatpush1.bf16.msra.mxu0 0
      %963 = vmatprep.subr.bf16.mxu0 0
      %964 = vmatpush1.bf16.msra.mxu0 0
      %965 = vmatprep.subr.bf16.mxu0 0
      %966 = vmatpush1.bf16.msra.mxu0 0
      %967 = vmatprep.subr.bf16.mxu0 0
      %968 = vmatpush1.bf16.msra.mxu0 0
      %969 = vmatprep.subr.bf16.mxu0 0
      %970 = vmatpush1.bf16.msra.mxu0 0
      %971 = vmatprep.subr.bf16.mxu0 0
      %972 = vmatpush1.bf16.msra.mxu0 0
      %973 = vmatprep.subr.bf16.mxu0 0
      %974 = vmatpush1.bf16.msra.mxu0 0
      %975 = vmatprep.subr.bf16.mxu0 0
      %976 = vmatpush1.bf16.msra.mxu0 0
      %977 = vmatprep.subr.bf16.mxu0 0
      %978 = vmatpush1.bf16.msra.mxu0 0
      %979 = vmatprep.subr.bf16.mxu0 0
      %980 = vmatpush1.bf16.msra.mxu0 0
      %981 = vmatprep.subr.bf16.mxu0 0
      %982 = vmatpush1.bf16.msra.mxu0 0
      %983 = vmatprep.mubr.bf16.mxu0 0
      %984 = vmatmul.mubr.bf16.gmra.mrb[0].mxu0 %v945
      %v985 = vpop.f32.mrb[0].mxu0
      %v986 = vadd.f32 0.0, %v985
      %v987 = vpop.f32.mrb[0].mxu0
      %v988 = vpop.f32.mrb[0].mxu0
      %v989 = vpop.f32.mrb[0].mxu0
      %990 = vdwg.mxu0
      %991 = vrot.lane.b32.xlu0 %v879, 120
      %v992 = vpop.permute.xlu0 %991
      %993 = vrot.lane.b32.xlu0 %v879, 88
      %v994 = vpop.permute.xlu0 %993
      %v996 = vsel %vm883, %v992, 0
      %v999 = vsel %vm883, %v994, 0
      %1001 = vmatprep.subr.bf16.mxu0 0
      %1002 = vmatpush1.bf16.xpose.msra.mxu0 %v999
      %1003 = vmatprep.subr.bf16.mxu0 0
      %1004 = vmatpush1.bf16.xpose.msra.mxu0 0
      %1005 = vmatprep.subr.bf16.mxu0 0
      %1006 = vmatpush1.bf16.xpose.msra.mxu0 0
      %1007 = vmatprep.subr.bf16.mxu0 0
      %1008 = vmatpush1.bf16.xpose.msra.mxu0 0
      %1009 = vmatprep.subr.bf16.mxu0 0
      %1010 = vmatpush1.bf16.xpose.msra.mxu0 0
      %1011 = vmatprep.subr.bf16.mxu0 0
      %1012 = vmatpush1.bf16.xpose.msra.mxu0 0
      %1013 = vmatprep.subr.bf16.mxu0 0
      %1014 = vmatpush1.bf16.xpose.msra.mxu0 0
      %1015 = vmatprep.subr.bf16.mxu0 0
      %1016 = vmatpush1.bf16.xpose.msra.mxu0 0
      %1017 = vmatprep.subr.bf16.mxu0 0
      %1018 = vmatpush1.bf16.xpose.msra.mxu0 0
      %1019 = vmatprep.subr.bf16.mxu0 0
      %1020 = vmatpush1.bf16.xpose.msra.mxu0 0
      %1021 = vmatprep.subr.bf16.mxu0 0
      %1022 = vmatpush1.bf16.xpose.msra.mxu0 0
      %1023 = vmatprep.subr.bf16.mxu0 0
      %1024 = vmatpush1.bf16.xpose.msra.mxu0 0
      %1025 = vmatprep.subr.bf16.mxu0 0
      %1026 = vmatpush1.bf16.xpose.msra.mxu0 0
      %1027 = vmatprep.subr.bf16.mxu0 0
      %1028 = vmatpush1.bf16.xpose.msra.mxu0 0
      %1029 = vmatprep.subr.bf16.mxu0 0
      %1030 = vmatpush1.bf16.xpose.msra.mxu0 0
      %1031 = vmatprep.subr.bf16.mxu0 0
      %1032 = vmatpush1.bf16.xpose.msra.mxu0 0
      %1033 = vmatprep.mubr.bf16.mxu0 0
      %1034 = vmatmul.mubr.bf16.gmra.mrb[0].mxu0 %v996
      %v1035 = vpop.f32.mrb[0].mxu0
      %v1036 = vadd.f32 0.0, %v1035
      %v1037 = vpop.f32.mrb[0].mxu0
      %v1038 = vpop.f32.mrb[0].mxu0
      %v1039 = vpop.f32.mrb[0].mxu0
      %1040 = vdwg.mxu0
      %v1041 = vsel %vm883, %v1036, -inf
      %1042 = vmax.xlane.f32.xlu0 %v1041
      %v1043 = vpop.xlane.xlu0 %1042
      %v1044 = vsub.f32 %v1036, %v1043
      %v1045 = vmul.f32 %v1044, 1.442695
      %v1046 = vpow.pop %v1045
      %v1047 = vsel %vm883, %v1046, 0.0
      %1048 = vadd.xlane.f32.xlu0 %v1047
      %v1049 = vpop.xlane.xlu0 %1048
      %v1050 = vrcp.pop %v1049
      %v1051 = vmul.f32 %v1046, %v1050
      %v1052 = vpack.c.bf16 %v1051, %v1051
      %1053 = vrot.lane.b32.xlu0 %v879, 56
      %v1054 = vpop.permute.xlu0 %1053
      %v1056 = vsel %vm883, %v1052, 0
      %v1059 = vsel %vm947, %v1054, 0
      %1061 = vmatprep.subr.bf16.mxu0 0
      %1062 = vmatpush1.bf16.msra.mxu0 %v1059
      %1063 = vmatprep.subr.bf16.mxu0 0
      %1064 = vmatpush1.bf16.msra.mxu0 0
      %1065 = vmatprep.subr.bf16.mxu0 0
      %1066 = vmatpush1.bf16.msra.mxu0 0
      %1067 = vmatprep.subr.bf16.mxu0 0
      %1068 = vmatpush1.bf16.msra.mxu0 0
      %1069 = vmatprep.subr.bf16.mxu0 0
      %1070 = vmatpush1.bf16.msra.mxu0 0
      %1071 = vmatprep.subr.bf16.mxu0 0
      %1072 = vmatpush1.bf16.msra.mxu0 0
      %1073 = vmatprep.subr.bf16.mxu0 0
      %1074 = vmatpush1.bf16.msra.mxu0 0
      %1075 = vmatprep.subr.bf16.mxu0 0
      %1076 = vmatpush1.bf16.msra.mxu0 0
      %1077 = vmatprep.subr.bf16.mxu0 0
      %1078 = vmatpush1.bf16.msra.mxu0 0
      %1079 = vmatprep.subr.bf16.mxu0 0
      %1080 = vmatpush1.bf16.msra.mxu0 0
      %1081 = vmatprep.subr.bf16.mxu0 0
      %1082 = vmatpush1.bf16.msra.mxu0 0
      %1083 = vmatprep.subr.bf16.mxu0 0
      %1084 = vmatpush1.bf16.msra.mxu0 0
      %1085 = vmatprep.subr.bf16.mxu0 0
      %1086 = vmatpush1.bf16.msra.mxu0 0
      %1087 = vmatprep.subr.bf16.mxu0 0
      %1088 = vmatpush1.bf16.msra.mxu0 0
      %1089 = vmatprep.subr.bf16.mxu0 0
      %1090 = vmatpush1.bf16.msra.mxu0 0
      %1091 = vmatprep.subr.bf16.mxu0 0
      %1092 = vmatpush1.bf16.msra.mxu0 0
      %1093 = vmatprep.mubr.bf16.mxu0 0
      %1094 = vmatmul.mubr.bf16.gmra.mrb[0].mxu0 %v1056
      %v1095 = vpop.f32.mrb[0].mxu0
      %v1096 = vadd.f32 0.0, %v1095
      %v1097 = vpop.f32.mrb[0].mxu0
      %v1098 = vpop.f32.mrb[0].mxu0
      %v1099 = vpop.f32.mrb[0].mxu0
      %1100 = vdwg.mxu0
      %1101 = vrot.lane.b32.xlu0 %v879, 112
      %v1102 = vpop.permute.xlu0 %1101
      %1103 = vrot.lane.b32.xlu0 %v879, 80
      %v1104 = vpop.permute.xlu0 %1103
      %v1106 = vsel %vm883, %v1102, 0
      %v1109 = vsel %vm883, %v1104, 0
      %1111 = vmatprep.subr.bf16.mxu0 0
      %1112 = vmatpush1.bf16.xpose.msra.mxu0 %v1109
      %1113 = vmatprep.subr.bf16.mxu0 0
      %1114 = vmatpush1.bf16.xpose.msra.mxu0 0
      %1115 = vmatprep.subr.bf16.mxu0 0
      %1116 = vmatpush1.bf16.xpose.msra.mxu0 0
      %1117 = vmatprep.subr.bf16.mxu0 0
      %1118 = vmatpush1.bf16.xpose.msra.mxu0 0
      %1119 = vmatprep.subr.bf16.mxu0 0
      %1120 = vmatpush1.bf16.xpose.msra.mxu0 0
      %1121 = vmatprep.subr.bf16.mxu0 0
      %1122 = vmatpush1.bf16.xpose.msra.mxu0 0
      %1123 = vmatprep.subr.bf16.mxu0 0
      %1124 = vmatpush1.bf16.xpose.msra.mxu0 0
      %1125 = vmatprep.subr.bf16.mxu0 0
      %1126 = vmatpush1.bf16.xpose.msra.mxu0 0
      %1127 = vmatprep.subr.bf16.mxu0 0
      %1128 = vmatpush1.bf16.xpose.msra.mxu0 0
      %1129 = vmatprep.subr.bf16.mxu0 0
      %1130 = vmatpush1.bf16.xpose.msra.mxu0 0
      %1131 = vmatprep.subr.bf16.mxu0 0
      %1132 = vmatpush1.bf16.xpose.msra.mxu0 0
      %1133 = vmatprep.subr.bf16.mxu0 0
      %1134 = vmatpush1.bf16.xpose.msra.mxu0 0
      %1135 = vmatprep.subr.bf16.mxu0 0
      %1136 = vmatpush1.bf16.xpose.msra.mxu0 0
      %1137 = vmatprep.subr.bf16.mxu0 0
      %1138 = vmatpush1.bf16.xpose.msra.mxu0 0
      %1139 = vmatprep.subr.bf16.mxu0 0
      %1140 = vmatpush1.bf16.xpose.msra.mxu0 0
      %1141 = vmatprep.subr.bf16.mxu0 0
      %1142 = vmatpush1.bf16.xpose.msra.mxu0 0
      %1143 = vmatprep.mubr.bf16.mxu0 0
      %1144 = vmatmul.mubr.bf16.gmra.mrb[0].mxu0 %v1106
      %v1145 = vpop.f32.mrb[0].mxu0
      %v1146 = vadd.f32 0.0, %v1145
      %v1147 = vpop.f32.mrb[0].mxu0
      %v1148 = vpop.f32.mrb[0].mxu0
      %v1149 = vpop.f32.mrb[0].mxu0
      %1150 = vdwg.mxu0
      %v1151 = vsel %vm883, %v1146, -inf
      %1152 = vmax.xlane.f32.xlu0 %v1151
      %v1153 = vpop.xlane.xlu0 %1152
      %v1154 = vsub.f32 %v1146, %v1153
      %v1155 = vmul.f32 %v1154, 1.442695
      %v1156 = vpow.pop %v1155
      %v1157 = vsel %vm883, %v1156, 0.0
      %1158 = vadd.xlane.f32.xlu0 %v1157
      %v1159 = vpop.xlane.xlu0 %1158
      %v1160 = vrcp.pop %v1159
      %v1161 = vmul.f32 %v1156, %v1160
      %v1162 = vpack.c.bf16 %v1161, %v1161
      %1163 = vrot.lane.b32.xlu0 %v879, 48
      %v1164 = vpop.permute.xlu0 %1163
      %v1166 = vsel %vm883, %v1162, 0
      %v1169 = vsel %vm947, %v1164, 0
      %1171 = vmatprep.subr.bf16.mxu0 0
      %1172 = vmatpush1.bf16.msra.mxu0 %v1169
      %1173 = vmatprep.subr.bf16.mxu0 0
      %1174 = vmatpush1.bf16.msra.mxu0 0
      %1175 = vmatprep.subr.bf16.mxu0 0
      %1176 = vmatpush1.bf16.msra.mxu0 0
      %1177 = vmatprep.subr.bf16.mxu0 0
      %1178 = vmatpush1.bf16.msra.mxu0 0
      %1179 = vmatprep.subr.bf16.mxu0 0
      %1180 = vmatpush1.bf16.msra.mxu0 0
      %1181 = vmatprep.subr.bf16.mxu0 0
      %1182 = vmatpush1.bf16.msra.mxu0 0
      %1183 = vmatprep.subr.bf16.mxu0 0
      %1184 = vmatpush1.bf16.msra.mxu0 0
      %1185 = vmatprep.subr.bf16.mxu0 0
      %1186 = vmatpush1.bf16.msra.mxu0 0
      %1187 = vmatprep.subr.bf16.mxu0 0
      %1188 = vmatpush1.bf16.msra.mxu0 0
      %1189 = vmatprep.subr.bf16.mxu0 0
      %1190 = vmatpush1.bf16.msra.mxu0 0
      %1191 = vmatprep.subr.bf16.mxu0 0
      %1192 = vmatpush1.bf16.msra.mxu0 0
      %1193 = vmatprep.subr.bf16.mxu0 0
      %1194 = vmatpush1.bf16.msra.mxu0 0
      %1195 = vmatprep.subr.bf16.mxu0 0
      %1196 = vmatpush1.bf16.msra.mxu0 0
      %1197 = vmatprep.subr.bf16.mxu0 0
      %1198 = vmatpush1.bf16.msra.mxu0 0
      %1199 = vmatprep.subr.bf16.mxu0 0
      %1200 = vmatpush1.bf16.msra.mxu0 0
      %1201 = vmatprep.subr.bf16.mxu0 0
      %1202 = vmatpush1.bf16.msra.mxu0 0
      %1203 = vmatprep.mubr.bf16.mxu0 0
      %1204 = vmatmul.mubr.bf16.gmra.mrb[0].mxu0 %v1166
      %v1205 = vpop.f32.mrb[0].mxu0
      %v1206 = vadd.f32 0.0, %v1205
      %v1207 = vpop.f32.mrb[0].mxu0
      %v1208 = vpop.f32.mrb[0].mxu0
      %v1209 = vpop.f32.mrb[0].mxu0
      %1210 = vdwg.mxu0
      %1211 = vrot.lane.b32.xlu0 %v879, 104
      %v1212 = vpop.permute.xlu0 %1211
      %1213 = vrot.lane.b32.xlu0 %v879, 72
      %v1214 = vpop.permute.xlu0 %1213
      %v1216 = vsel %vm883, %v1212, 0
      %v1219 = vsel %vm883, %v1214, 0
      %1221 = vmatprep.subr.bf16.mxu0 0
      %1222 = vmatpush1.bf16.xpose.msra.mxu0 %v1219
      %1223 = vmatprep.subr.bf16.mxu0 0
      %1224 = vmatpush1.bf16.xpose.msra.mxu0 0
      %1225 = vmatprep.subr.bf16.mxu0 0
      %1226 = vmatpush1.bf16.xpose.msra.mxu0 0
      %1227 = vmatprep.subr.bf16.mxu0 0
      %1228 = vmatpush1.bf16.xpose.msra.mxu0 0
      %1229 = vmatprep.subr.bf16.mxu0 0
      %1230 = vmatpush1.bf16.xpose.msra.mxu0 0
      %1231 = vmatprep.subr.bf16.mxu0 0
      %1232 = vmatpush1.bf16.xpose.msra.mxu0 0
      %1233 = vmatprep.subr.bf16.mxu0 0
      %1234 = vmatpush1.bf16.xpose.msra.mxu0 0
      %1235 = vmatprep.subr.bf16.mxu0 0
      %1236 = vmatpush1.bf16.xpose.msra.mxu0 0
      %1237 = vmatprep.subr.bf16.mxu0 0
      %1238 = vmatpush1.bf16.xpose.msra.mxu0 0
      %1239 = vmatprep.subr.bf16.mxu0 0
      %1240 = vmatpush1.bf16.xpose.msra.mxu0 0
      %1241 = vmatprep.subr.bf16.mxu0 0
      %1242 = vmatpush1.bf16.xpose.msra.mxu0 0
      %1243 = vmatprep.subr.bf16.mxu0 0
      %1244 = vmatpush1.bf16.xpose.msra.mxu0 0
      %1245 = vmatprep.subr.bf16.mxu0 0
      %1246 = vmatpush1.bf16.xpose.msra.mxu0 0
      %1247 = vmatprep.subr.bf16.mxu0 0
      %1248 = vmatpush1.bf16.xpose.msra.mxu0 0
      %1249 = vmatprep.subr.bf16.mxu0 0
      %1250 = vmatpush1.bf16.xpose.msra.mxu0 0
      %1251 = vmatprep.subr.bf16.mxu0 0
      %1252 = vmatpush1.bf16.xpose.msra.mxu0 0
      %1253 = vmatprep.mubr.bf16.mxu0 0
      %1254 = vmatmul.mubr.bf16.gmra.mrb[0].mxu0 %v1216
      %v1255 = vpop.f32.mrb[0].mxu0
      %v1256 = vadd.f32 0.0, %v1255
      %v1257 = vpop.f32.mrb[0].mxu0
      %v1258 = vpop.f32.mrb[0].mxu0
      %v1259 = vpop.f32.mrb[0].mxu0
      %1260 = vdwg.mxu0
      %v1261 = vsel %vm883, %v1256, -inf
      %1262 = vmax.xlane.f32.xlu0 %v1261
      %v1263 = vpop.xlane.xlu0 %1262
      %v1264 = vsub.f32 %v1256, %v1263
      %v1265 = vmul.f32 %v1264, 1.442695
      %v1266 = vpow.pop %v1265
      %v1267 = vsel %vm883, %v1266, 0.0
      %1268 = vadd.xlane.f32.xlu0 %v1267
      %v1269 = vpop.xlane.xlu0 %1268
      %v1270 = vrcp.pop %v1269
      %v1271 = vmul.f32 %v1266, %v1270
      %v1272 = vpack.c.bf16 %v1271, %v1271
      %1273 = vrot.lane.b32.xlu0 %v879, 40
      %v1274 = vpop.permute.xlu0 %1273
      %v1276 = vsel %vm883, %v1272, 0
      %v1279 = vsel %vm947, %v1274, 0
      %1281 = vmatprep.subr.bf16.mxu0 0
      %1282 = vmatpush1.bf16.msra.mxu0 %v1279
      %1283 = vmatprep.subr.bf16.mxu0 0
      %1284 = vmatpush1.bf16.msra.mxu0 0
      %1285 = vmatprep.subr.bf16.mxu0 0
      %1286 = vmatpush1.bf16.msra.mxu0 0
      %1287 = vmatprep.subr.bf16.mxu0 0
      %1288 = vmatpush1.bf16.msra.mxu0 0
      %1289 = vmatprep.subr.bf16.mxu0 0
      %1290 = vmatpush1.bf16.msra.mxu0 0
      %1291 = vmatprep.subr.bf16.mxu0 0
      %1292 = vmatpush1.bf16.msra.mxu0 0
      %1293 = vmatprep.subr.bf16.mxu0 0
      %1294 = vmatpush1.bf16.msra.mxu0 0
      %1295 = vmatprep.subr.bf16.mxu0 0
      %1296 = vmatpush1.bf16.msra.mxu0 0
      %1297 = vmatprep.subr.bf16.mxu0 0
      %1298 = vmatpush1.bf16.msra.mxu0 0
      %1299 = vmatprep.subr.bf16.mxu0 0
      %1300 = vmatpush1.bf16.msra.mxu0 0
      %1301 = vmatprep.subr.bf16.mxu0 0
      %1302 = vmatpush1.bf16.msra.mxu0 0
      %1303 = vmatprep.subr.bf16.mxu0 0
      %1304 = vmatpush1.bf16.msra.mxu0 0
      %1305 = vmatprep.subr.bf16.mxu0 0
      %1306 = vmatpush1.bf16.msra.mxu0 0
      %1307 = vmatprep.subr.bf16.mxu0 0
      %1308 = vmatpush1.bf16.msra.mxu0 0
      %1309 = vmatprep.subr.bf16.mxu0 0
      %1310 = vmatpush1.bf16.msra.mxu0 0
      %1311 = vmatprep.subr.bf16.mxu0 0
      %1312 = vmatpush1.bf16.msra.mxu0 0
      %1313 = vmatprep.mubr.bf16.mxu0 0
      %1314 = vmatmul.mubr.bf16.gmra.mrb[0].mxu0 %v1276
      %v1315 = vpop.f32.mrb[0].mxu0
      %v1316 = vadd.f32 0.0, %v1315
      %v1317 = vpop.f32.mrb[0].mxu0
      %v1318 = vpop.f32.mrb[0].mxu0
      %v1319 = vpop.f32.mrb[0].mxu0
      %1320 = vdwg.mxu0
      %1322 = vrot.lane.b32.xlu0 %v1096, 8
      %v1323 = vpop.permute.xlu0 %1322
      %1326 = vrot.lane.b32.xlu0 %v1206, 16
      %v1327 = vpop.permute.xlu0 %1326
      %1330 = vrot.lane.b32.xlu0 %v1316, 24
      %v1331 = vpop.permute.xlu0 %1330
      %v1333 = vsel %vm883, %v986, %v1323
      %vm1334 = vcmask 130048
      %v1335 = vsel %vm1334, %v1333, %v1327
      %vm1336 = vcmask 195584
      %v1337 = vsel %vm1336, %v1335, %v1331
      %v1338 = vpack.c.bf16 %v1337, %v1337
      %v1339 = vld [vmem:[%s767] sm:$0xf]
      %v1340 = vld [vmem:[%s767 + $0x4] sm:$0xf]
      %v1341 = vld [vmem:[%s767 + $0x8] sm:$0xf]
      %v1342 = vld [vmem:[%s767 + $0xc] sm:$0xf]
      %v1343 = vld [vmem:[%s770] sm:$0x1]
      %v1345 = vlaneseq
      %v1346 = vshrl.u32 %v1345, 7
      %v1347 = vsub.s32 0, %v1346
      %v1348 = vrot.slane %v1343, %v1347
      %v1354 = vunpack.c.l.b16 %v1339
      %v1355 = vunpack.c.l.b16 %v1340
      %v1356 = vunpack.c.l.b16 %v1341
      %v1357 = vunpack.c.l.b16 %v1342
      %v1358 = vpack.c.b16 %v1355, %v1354
      %v1359 = vpack.c.b16 %v1357, %v1356
      %v1363 = vsel %vm835, %v1338, 0
      %1365 = vmatprep.subr.bf16.mxu0 0
      %1366 = vmatpush1.bf16.msra.mxu0 %v1358
      %1367 = vmatprep.subr.bf16.mxu0 0
      %1368 = vmatpush1.bf16.msra.mxu0 %v1359
      %1369 = vmatprep.subr.bf16.mxu0 0
      %1370 = vmatpush1.bf16.msra.mxu0 0
      %1371 = vmatprep.subr.bf16.mxu0 0
      %1372 = vmatpush1.bf16.msra.mxu0 0
      %1373 = vmatprep.subr.bf16.mxu0 0
      %1374 = vmatpush1.bf16.msra.mxu0 0
      %1375 = vmatprep.subr.bf16.mxu0 0
      %1376 = vmatpush1.bf16.msra.mxu0 0
      %1377 = vmatprep.subr.bf16.mxu0 0
      %1378 = vmatpush1.bf16.msra.mxu0 0
      %1379 = vmatprep.subr.bf16.mxu0 0
      %1380 = vmatpush1.bf16.msra.mxu0 0
      %1381 = vmatprep.subr.bf16.mxu0 0
      %1382 = vmatpush1.bf16.msra.mxu0 0
      %1383 = vmatprep.subr.bf16.mxu0 0
      %1384 = vmatpush1.bf16.msra.mxu0 0
      %1385 = vmatprep.subr.bf16.mxu0 0
      %1386 = vmatpush1.bf16.msra.mxu0 0
      %1387 = vmatprep.subr.bf16.mxu0 0
      %1388 = vmatpush1.bf16.msra.mxu0 0
      %1389 = vmatprep.subr.bf16.mxu0 0
      %1390 = vmatpush1.bf16.msra.mxu0 0
      %1391 = vmatprep.subr.bf16.mxu0 0
      %1392 = vmatpush1.bf16.msra.mxu0 0
      %1393 = vmatprep.subr.bf16.mxu0 0
      %1394 = vmatpush1.bf16.msra.mxu0 0
      %1395 = vmatprep.subr.bf16.mxu0 0
      %1396 = vmatpush1.bf16.msra.mxu0 0
      %1397 = vmatprep.mubr.bf16.mxu0 0
      %1398 = vmatmul.mubr.bf16.gmra.mrb[0].mxu0 %v1363
      %v1399 = vpop.f32.mrb[0].mxu0
      %v1400 = vadd.f32 %v1348, %v1399
      %v1401 = vpop.f32.mrb[0].mxu0
      %v1402 = vpop.f32.mrb[0].mxu0
      %v1403 = vpop.f32.mrb[0].mxu0
      %1404 = vdwg.mxu0
      %v1405 = vadd.f32 %v810, %v1400
      %v1406 = vld [vmem:[%s773] sm:$0x1]
      %v1407 = vld [vmem:[%s776] sm:$0x1]
      %v1408 = vsel %vm835, %v1405, 0.0
      %1409 = vadd.xlane.f32.xlu0 %v1408
      %v1410 = vpop.xlane.xlu0 %1409
      %v1411 = vrcp.pop 32.0
      %v1412 = vmul.f32 %v1410, %v1411
      %v1413 = vsub.f32 %v1405, %v1412
      %v1414 = vmul.f32 %v1413, %v1413
      %v1415 = vsel %vm835, %v1414, 0.0
      %1416 = vadd.xlane.f32.xlu0 %v1415
      %v1417 = vpop.xlane.xlu0 %1416
      %v1418 = vmul.f32 %v1417, %v1411
      %v1419 = vadd.f32 %v1418, 1e-05
      %v1420 = vrsqrt.pop %v1419
      %v1421 = vmul.f32 %v1413, %v1420
      %v1423 = vlaneseq
      %v1424 = vshrl.u32 %v1423, 7
      %v1425 = vsub.s32 0, %v1424
      %v1426 = vrot.slane %v1406, %v1425
      %v1428 = vmul.f32 %v1421, %v1426
      %v1430 = vlaneseq
      %v1431 = vshrl.u32 %v1430, 7
      %v1432 = vsub.s32 0, %v1431
      %v1433 = vrot.slane %v1407, %v1432
      %v1435 = vadd.f32 %v1428, %v1433
      %v1436 = vpack.c.bf16 %v1435, %v1435
      %v1437 = vld [vmem:[%s787] sm:$0xf]
      %v1438 = vld [vmem:[%s787 + $0x4] sm:$0xf]
      %v1439 = vld [vmem:[%s787 + $0x8] sm:$0xf]
      %v1440 = vld [vmem:[%s787 + $0xc] sm:$0xf]
      %v1441 = vld [vmem:[%s790] sm:$0x1]
      %v1443 = vlaneseq
      %v1444 = vshrl.u32 %v1443, 7
      %v1445 = vsub.s32 0, %v1444
      %v1446 = vrot.slane %v1441, %v1445
      %v1452 = vunpack.c.l.b16 %v1437
      %v1453 = vunpack.c.l.b16 %v1438
      %v1454 = vunpack.c.l.b16 %v1439
      %v1455 = vunpack.c.l.b16 %v1440
      %v1456 = vpack.c.b16 %v1453, %v1452
      %v1457 = vpack.c.b16 %v1455, %v1454
      %v1461 = vsel %vm835, %v1436, 0
      %1463 = vmatprep.subr.bf16.mxu0 0
      %1464 = vmatpush1.bf16.msra.mxu0 %v1456
      %1465 = vmatprep.subr.bf16.mxu0 0
      %1466 = vmatpush1.bf16.msra.mxu0 %v1457
      %1467 = vmatprep.subr.bf16.mxu0 0
      %1468 = vmatpush1.bf16.msra.mxu0 0
      %1469 = vmatprep.subr.bf16.mxu0 0
      %1470 = vmatpush1.bf16.msra.mxu0 0
      %1471 = vmatprep.subr.bf16.mxu0 0
      %1472 = vmatpush1.bf16.msra.mxu0 0
      %1473 = vmatprep.subr.bf16.mxu0 0
      %1474 = vmatpush1.bf16.msra.mxu0 0
      %1475 = vmatprep.subr.bf16.mxu0 0
      %1476 = vmatpush1.bf16.msra.mxu0 0
      %1477 = vmatprep.subr.bf16.mxu0 0
      %1478 = vmatpush1.bf16.msra.mxu0 0
      %1479 = vmatprep.subr.bf16.mxu0 0
      %1480 = vmatpush1.bf16.msra.mxu0 0
      %1481 = vmatprep.subr.bf16.mxu0 0
      %1482 = vmatpush1.bf16.msra.mxu0 0
      %1483 = vmatprep.subr.bf16.mxu0 0
      %1484 = vmatpush1.bf16.msra.mxu0 0
      %1485 = vmatprep.subr.bf16.mxu0 0
      %1486 = vmatpush1.bf16.msra.mxu0 0
      %1487 = vmatprep.subr.bf16.mxu0 0
      %1488 = vmatpush1.bf16.msra.mxu0 0
      %1489 = vmatprep.subr.bf16.mxu0 0
      %1490 = vmatpush1.bf16.msra.mxu0 0
      %1491 = vmatprep.subr.bf16.mxu0 0
      %1492 = vmatpush1.bf16.msra.mxu0 0
      %1493 = vmatprep.subr.bf16.mxu0 0
      %1494 = vmatpush1.bf16.msra.mxu0 0
      %1495 = vmatprep.mubr.bf16.mxu0 0
      %1496 = vmatmul.mubr.bf16.gmra.mrb[0].mxu0 %v1461
      %v1497 = vpop.f32.mrb[0].mxu0
      %v1498 = vadd.f32 %v1446, %v1497
      %v1499 = vpop.f32.mrb[0].mxu0
      %v1500 = vpop.f32.mrb[0].mxu0
      %v1501 = vpop.f32.mrb[0].mxu0
      %1502 = vdwg.mxu0
      %v1503 = vmax.f32 %v1498, 0.0
      %v1504 = vpack.c.bf16 %v1503, %v1503
      %v1505 = vld [vmem:[%s795] sm:$0xf]
      %v1506 = vld [vmem:[%s795 + $0x4] sm:$0xf]
      %v1507 = vld [vmem:[%s795 + $0x8] sm:$0xf]
      %v1508 = vld [vmem:[%s795 + $0xc] sm:$0xf]
      %v1509 = vld [vmem:[%s795 + $0x10] sm:$0xf]
      %v1510 = vld [vmem:[%s795 + $0x14] sm:$0xf]
      %v1511 = vld [vmem:[%s795 + $0x18] sm:$0xf]
      %v1512 = vld [vmem:[%s795 + $0x1c] sm:$0xf]
      %v1513 = vld [vmem:[%s798] sm:$0x1]
      %v1515 = vlaneseq
      %v1516 = vshrl.u32 %v1515, 7
      %v1517 = vsub.s32 0, %v1516
      %v1518 = vrot.slane %v1513, %v1517
      %v1528 = vunpack.c.l.b16 %v1505
      %v1529 = vunpack.c.l.b16 %v1506
      %v1530 = vunpack.c.l.b16 %v1507
      %v1531 = vunpack.c.l.b16 %v1508
      %v1532 = vunpack.c.l.b16 %v1509
      %v1533 = vunpack.c.l.b16 %v1510
      %v1534 = vunpack.c.l.b16 %v1511
      %v1535 = vunpack.c.l.b16 %v1512
      %v1536 = vpack.c.b16 %v1529, %v1528
      %v1537 = vpack.c.b16 %v1531, %v1530
      %v1538 = vpack.c.b16 %v1533, %v1532
      %v1539 = vpack.c.b16 %v1535, %v1534
      %vm1544 = vcmask 523264
      %v1546 = vsel %vm1544, %v1504, 0
      %1548 = vmatprep.subr.bf16.mxu0 0
      %1549 = vmatpush1.bf16.msra.mxu0 %v1536
      %1550 = vmatprep.subr.bf16.mxu0 0
      %1551 = vmatpush1.bf16.msra.mxu0 %v1537
      %1552 = vmatprep.subr.bf16.mxu0 0
      %1553 = vmatpush1.bf16.msra.mxu0 %v1538
      %1554 = vmatprep.subr.bf16.mxu0 0
      %1555 = vmatpush1.bf16.msra.mxu0 %v1539
      %1556 = vmatprep.subr.bf16.mxu0 0
      %1557 = vmatpush1.bf16.msra.mxu0 0
      %1558 = vmatprep.subr.bf16.mxu0 0
      %1559 = vmatpush1.bf16.msra.mxu0 0
      %1560 = vmatprep.subr.bf16.mxu0 0
      %1561 = vmatpush1.bf16.msra.mxu0 0
      %1562 = vmatprep.subr.bf16.mxu0 0
      %1563 = vmatpush1.bf16.msra.mxu0 0
      %1564 = vmatprep.subr.bf16.mxu0 0
      %1565 = vmatpush1.bf16.msra.mxu0 0
      %1566 = vmatprep.subr.bf16.mxu0 0
      %1567 = vmatpush1.bf16.msra.mxu0 0
      %1568 = vmatprep.subr.bf16.mxu0 0
      %1569 = vmatpush1.bf16.msra.mxu0 0
      %1570 = vmatprep.subr.bf16.mxu0 0
      %1571 = vmatpush1.bf16.msra.mxu0 0
      %1572 = vmatprep.subr.bf16.mxu0 0
      %1573 = vmatpush1.bf16.msra.mxu0 0
      %1574 = vmatprep.subr.bf16.mxu0 0
      %1575 = vmatpush1.bf16.msra.mxu0 0
      %1576 = vmatprep.subr.bf16.mxu0 0
      %1577 = vmatpush1.bf16.msra.mxu0 0
      %1578 = vmatprep.subr.bf16.mxu0 0
      %1579 = vmatpush1.bf16.msra.mxu0 0
      %1580 = vmatprep.mubr.bf16.mxu0 0
      %1581 = vmatmul.mubr.bf16.gmra.mrb[0].mxu0 %v1546
      %v1582 = vpop.f32.mrb[0].mxu0
      %v1583 = vadd.f32 %v1518, %v1582
      %v1584 = vpop.f32.mrb[0].mxu0
      %v1585 = vpop.f32.mrb[0].mxu0
      %v1586 = vpop.f32.mrb[0].mxu0
      %1587 = vdwg.mxu0
      %v1588 = vadd.f32 %v1435, %v1583
      %v1589 = vld [vmem:[%s779] sm:$0x1]
      %v1590 = vld [vmem:[%s782] sm:$0x1]
      %v1591 = vsel %vm835, %v1588, 0.0
      %1592 = vadd.xlane.f32.xlu0 %v1591
      %v1593 = vpop.xlane.xlu0 %1592
      %v1594 = vmul.f32 %v1593, %v1411
      %v1595 = vsub.f32 %v1588, %v1594
      %v1596 = vmul.f32 %v1595, %v1595
      %v1597 = vsel %vm835, %v1596, 0.0
      %1598 = vadd.xlane.f32.xlu0 %v1597
      %v1599 = vpop.xlane.xlu0 %1598
      %v1600 = vmul.f32 %v1599, %v1411
      %v1601 = vadd.f32 %v1600, 1e-05
      %v1602 = vrsqrt.pop %v1601
      %v1603 = vmul.f32 %v1595, %v1602
      %v1605 = vlaneseq
      %v1606 = vshrl.u32 %v1605, 7
      %v1607 = vsub.s32 0, %v1606
      %v1608 = vrot.slane %v1589, %v1607
      %v1610 = vmul.f32 %v1603, %v1608
      %v1612 = vlaneseq
      %v1613 = vshrl.u32 %v1612, 7
      %v1614 = vsub.s32 0, %v1613
      %v1615 = vrot.slane %v1590, %v1614
      %v1617 = vadd.f32 %v1610, %v1615
      %1618 = vst.msk [vmem:[#allocation2] sm:$0xff] %vm835, %v1617
      %p1619 = scmp.eq.s32.totalorder %s37, 1
      // Predicated region
      $region101: #{stp_forward.1} parent=95 // pred_check
        %p1620 = pneg %p1619
      $region102: #{stp_forward.1} parent=95 // pred_check_branch
        %1622 = sbr.rel (%p1620) target = $region104
      $region103: #{stp_forward.1} parent=95 // pred_region
        %v1623 = vld [vmem:[%s13] sm:$0x1]
        %v1624 = vld [vmem:[%s14] sm:$0x1]
        %v1625 = vsel %vm835, %v1617, 0.0
        %1626 = vadd.xlane.f32.xlu0 %v1625
        %v1627 = vpop.xlane.xlu0 %1626
        %v1628 = vmul.f32 %v1627, %v1411
        %v1629 = vsub.f32 %v1617, %v1628
        %v1630 = vmul.f32 %v1629, %v1629
        %v1631 = vsel %vm835, %v1630, 0.0
        %1632 = vadd.xlane.f32.xlu0 %v1631
        %v1633 = vpop.xlane.xlu0 %1632
        %v1634 = vmul.f32 %v1633, %v1411
        %v1635 = vadd.f32 %v1634, 1e-05
        %v1636 = vrsqrt.pop %v1635
        %v1637 = vmul.f32 %v1629, %v1636
        %v1639 = vlaneseq
        %v1640 = vshrl.u32 %v1639, 7
        %v1641 = vsub.s32 0, %v1640
        %v1642 = vrot.slane %v1623, %v1641
        %v1644 = vmul.f32 %v1637, %v1642
        %v1646 = vlaneseq
        %v1647 = vshrl.u32 %v1646, 7
        %v1648 = vsub.s32 0, %v1647
        %v1649 = vrot.slane %v1624, %v1648
        %v1651 = vadd.f32 %v1644, %v1649
        %v1652 = vsel %vm835, %v1651, -inf
        %v1653 = vrot.slane %v1652, 4
        %v1654 = vmax.f32 %v1652, %v1653
        %v1655 = vrot.slane %v1654, 2
        %v1656 = vmax.f32 %v1654, %v1655
        %v1657 = vrot.slane %v1656, 1
        %v1658 = vmax.f32 %v1656, %v1657
        %v1659 = vpack.c.bf16 %v1658, %v1658
        %v1660 = vld [vmem:[%s15] sm:$0xf]
        %v1661 = vld [vmem:[%s15 + $0x4] sm:$0xf]
        %v1662 = vld [vmem:[%s15 + $0x8] sm:$0xf]
        %v1663 = vld [vmem:[%s15 + $0xc] sm:$0xf]
        %v1664 = vld [vmem:[%s16] sm:$0x1]
        %v1669 = vunpack.c.l.b16 %v1660
        %v1670 = vunpack.c.l.b16 %v1661
        %v1671 = vunpack.c.l.b16 %v1662
        %v1672 = vunpack.c.l.b16 %v1663
        %v1673 = vpack.c.b16 %v1670, %v1669
        %v1674 = vpack.c.b16 %v1672, %v1671
        %v1678 = vsel %vm835, %v1659, 0
        %1680 = vmatprep.subr.bf16.mxu0 0
        %1681 = vmatpush1.bf16.msra.mxu0 %v1673
        %1682 = vmatprep.subr.bf16.mxu0 0
        %1683 = vmatpush1.bf16.msra.mxu0 %v1674
        %1684 = vmatprep.subr.bf16.mxu0 0
        %1685 = vmatpush1.bf16.msra.mxu0 0
        %1686 = vmatprep.subr.bf16.mxu0 0
        %1687 = vmatpush1.bf16.msra.mxu0 0
        %1688 = vmatprep.subr.bf16.mxu0 0
        %1689 = vmatpush1.bf16.msra.mxu0 0
        %1690 = vmatprep.subr.bf16.mxu0 0
        %1691 = vmatpush1.bf16.msra.mxu0 0
        %1692 = vmatprep.subr.bf16.mxu0 0
        %1693 = vmatpush1.bf16.msra.mxu0 0
        %1694 = vmatprep.subr.bf16.mxu0 0
        %1695 = vmatpush1.bf16.msra.mxu0 0
        %1696 = vmatprep.subr.bf16.mxu0 0
        %1697 = vmatpush1.bf16.msra.mxu0 0
        %1698 = vmatprep.subr.bf16.mxu0 0
        %1699 = vmatpush1.bf16.msra.mxu0 0
        %1700 = vmatprep.subr.bf16.mxu0 0
        %1701 = vmatpush1.bf16.msra.mxu0 0
        %1702 = vmatprep.subr.bf16.mxu0 0
        %1703 = vmatpush1.bf16.msra.mxu0 0
        %1704 = vmatprep.subr.bf16.mxu0 0
        %1705 = vmatpush1.bf16.msra.mxu0 0
        %1706 = vmatprep.subr.bf16.mxu0 0
        %1707 = vmatpush1.bf16.msra.mxu0 0
        %1708 = vmatprep.subr.bf16.mxu0 0
        %1709 = vmatpush1.bf16.msra.mxu0 0
        %1710 = vmatprep.subr.bf16.mxu0 0
        %1711 = vmatpush1.bf16.msra.mxu0 0
        %1712 = vmatprep.mubr.bf16.mxu0 0
        %1713 = vmatmul.mubr.bf16.gmra.mrb[0].mxu0 %v1678
        %v1714 = vpop.f32.mrb[0].mxu0
        %v1715 = vadd.f32 %v1664, %v1714
        %v1716 = vpop.f32.mrb[0].mxu0
        %v1717 = vpop.f32.mrb[0].mxu0
        %v1718 = vpop.f32.mrb[0].mxu0
        %1719 = vdwg.mxu0
        %v1720 = vmax.f32 %v1715, 0.0
        %v1721 = vld [vmem:[%s17] sm:$0x1]
        %v1722 = vmul.f32 %v1720, %v1721
        %vm1723 = vcmask 516096
        %v1724 = vsel %vm1723, %v1722, 0.0
        %1725 = vadd.xlane.f32.xlu0 %v1724
        %v1726 = vpop.xlane.xlu0 %1725
        %v1727 = vld [vmem:[#allocation3] sm:$0x1]
        %v1728 = vadd.f32 %v1726, %v1727
        %vm1729 = vcmask 0
        %1730 = vst.msk [vmem:[%s801] sm:$0x1] %vm1729, %v1728
      $region104: #{stp_forward.1} parent=95 // pred_fallthru
        _
      %p1731 = scmp.lt.s32.totalorder %s36, 1
      %s1732 = scalar_select %p1731, %s36, 1
      %s1733 = scalar_lea.vmem %s19, %s1732
      // Predicated region
      $region105: #{stp_forward.1} parent=95 // pred_check
        %p1734 = pneg %p526
      $region106: #{stp_forward.1} parent=95 // pred_check_branch
        %1736 = sbr.rel (%p1734) target = $region108
      $region107: #{stp_forward.1} parent=95 // pred_region
        _
      $region108: #{stp_forward.1} parent=95 // pred_fallthru
        _
    $region96: #{stp_forward.1} parent=5 // pred_fallthru
      _
    %p1737 = scmp.le.s32.totalorder 2, %s27
    // Predicated region
    $region109: #{stp_forward.1} parent=5 // pred_check
      %p1738 = pneg %p1737
    $region110: #{stp_forward.1} parent=5 // pred_check_branch
      %1740 = sbr.rel (%p1738) target = $region112
    $region111: #{stp_forward.1} parent=5 // pred_region
      %s1741 = ssub.s32 %s27, 2
      // Predicated region
      $region113: #{stp_forward.1} parent=111 // pred_check
        %p1742 = pneg %p532
      $region114: #{stp_forward.1} parent=111 // pred_check_branch
        %1744 = sbr.rel (%p1742) target = $region116
      $region115: #{stp_forward.1} parent=111 // pred_region
        %p1745 = scmp.lt.s32.totalorder %s38, 1
        %s1746 = scalar_select %p1745, %s38, 1
        %s1747 = scalar_lea.vmem %s19, %s1746
      $region116: #{stp_forward.1} parent=111 // pred_fallthru
        _
    $region112: #{stp_forward.1} parent=5 // pred_fallthru
      _
  $region6: #{stp_forward.1} parent=0 // loop_footer
    %s31 = sadd.s32 1, %s27
  $region7: #{stp_forward.1} parent=0 // loop_footer_branch
    %26 = sbr.rel target = $region3
  $region8: #{stp_forward.1} parent=0 // loop_exit
    _

</llo_original>
